<compile_context>
chip_gen: v7x
topology: tpu7x:2x2x1
jax: 0.10.0
libtpu: 0.0.40
codegen_flags: <defaults>
</compile_context>

<pallas_src>
import math

import jax
import jax.numpy as jnp
from jax.experimental import pallas as pl
from jax.experimental.pallas import tpu as pltpu


def senet_kernel(x_ref, w1_ref, w2_ref, o_ref):
    # x_ref : (Bt, C, HW)  activation block, native dtype (f32 or bf16)
    # w1_ref: (C, Ch)      fc1 weight, transposed to (in, out); bias=False
    # w2_ref: (Ch, C)      fc2 weight, transposed to (in, out); bias=False
    # o_ref : (Bt, C, HW)
    hw = x_ref.shape[-1]

    # Squeeze: global average pool over the spatial (lane) axis.
    # f32-accumulating reduce -- no full f32 copy of the block is materialized.
    avg = jnp.sum(x_ref[...], axis=-1, dtype=jnp.float32) * (1.0 / hw)   # (Bt, C)

    # Excitation: FC -> ReLU -> FC -> sigmoid, in f32 (MXU + EUP).
    # Bt rows per step keep MXU sublanes from being wasted on M=1 matmuls.
    h = jnp.dot(avg, w1_ref[...].astype(jnp.float32),
                preferred_element_type=jnp.float32)                       # (Bt, Ch)
    h = jnp.maximum(h, 0.0)
    s = jnp.dot(h, w2_ref[...].astype(jnp.float32),
                preferred_element_type=jnp.float32)                       # (Bt, C)
    s = jax.nn.sigmoid(s)

    # Scale: cast the tiny gate once to the activation dtype and broadcast it
    # over the spatial lanes.  (The lane->sublane relayout of the (Bt, C) gate
    # is a couple of XLU ops on a fraction of a vreg -- negligible next to
    # streaming the (Bt, C, HW) block; x itself is never relaid out/upcast.)
    gate = s.astype(o_ref.dtype)[:, :, None]                              # (Bt, C, 1)
    o_ref[...] = x_ref[...] * gate


def senet_forward(x, w1_t, w2_t, *, batch_tile=4):
    """SE block forward.

    x    : (B, C, H, W) NCHW (PyTorch layout).
    w1_t : (C, C // ratio)  == fc1.weight.T   (fc1 has bias=False)
    w2_t : (C // ratio, C)  == fc2.weight.T   (fc2 has bias=False)
    """
    b, c, h, w = x.shape
    hw = h * w
    ch = w1_t.shape[1]
    itemsize = jnp.dtype(x.dtype).itemsize

    # Batch tile: amortize per-grid-step overhead, but keep the double-buffered
    # (input + output) blocks comfortably inside v7x's 64 MiB physical VMEM.
    per_buffer_budget = 8 << 20
    bt = max(1, min(batch_tile, b))
    while bt > 1 and bt * c * hw * itemsize > per_buffer_budget:
        bt = max(1, bt // 2)
    while b % bt:                       # keep the grid exact (no padded blocks)
        bt -= 1

    block_bytes = bt * c * hw * itemsize
    w_bytes = (c * ch + ch * c) * jnp.dtype(w1_t.dtype).itemsize
    # 2x double-buffered input + 2x double-buffered output + weights + headroom.
    vmem_limit = int(min(max(4 * block_bytes + 4 * w_bytes + (4 << 20), 32 << 20),
                         64 << 20))

    x3 = x.reshape(b, c, hw)            # contiguous row-major reshape, no copy

    out = pl.pallas_call(
        senet_kernel,
        out_shape=jax.ShapeDtypeStruct((b, c, hw), x.dtype),
        grid_spec=pltpu.PrefetchScalarGridSpec(
            num_scalar_prefetch=0,
            # NOTE(v7x): with a single 'parallel' grid axis, both TensorCores
            # are busy only when b // bt >= 2; keep bt <= b // 2 for small B.
            grid=(b // bt,),
            in_specs=[
                pl.BlockSpec((bt, c, hw), lambda i: (i, 0, 0)),
                pl.BlockSpec((c, ch), lambda i: (0, 0)),     # weights resident
                pl.BlockSpec((ch, c), lambda i: (0, 0)),
            ],
            out_specs=pl.BlockSpec((bt, c, hw), lambda i: (i, 0, 0)),
        ),
        compiler_params=pltpu.CompilerParams(
            dimension_semantics=("parallel",),
            vmem_limit_bytes=vmem_limit,
        ),
    )(x3, w1_t, w2_t)

    return out.reshape(b, c, h, w)


def senet_ref(x, w1_t, w2_t):
    """Pure-JAX reference matching the PyTorch forward (bias-free FCs)."""
    avg = jnp.mean(x.astype(jnp.float32), axis=(2, 3))       # (B, C)
    h = jnp.maximum(avg @ w1_t.astype(jnp.float32), 0.0)     # (B, C//r)
    s = jax.nn.sigmoid(h @ w2_t.astype(jnp.float32))         # (B, C)
    return x * s.astype(x.dtype)[:, :, None, None]


if __name__ == "__main__":
    # Small shapes consistent with the module (ratio=16); HW=256 is lane-dense.
    B, C, H, W = 8, 128, 16, 16
    RATIO = 16
    CH = C // RATIO                      # hidden = 8

    key = jax.random.PRNGKey(0)
    kx, k1, k2 = jax.random.split(key, 3)

    x = jax.random.normal(kx, (B, C, H, W), dtype=jnp.float32)
    # nn.Linear(C, CH, bias=False).weight has shape (CH, C); we pass the
    # transpose so the kernel computes avg @ W1^T directly (and likewise W2).
    w1_t = jax.random.normal(k1, (C, CH), dtype=jnp.float32) * (1.0 / math.sqrt(C))
    w2_t = jax.random.normal(k2, (CH, C), dtype=jnp.float32) * (1.0 / math.sqrt(CH))

    out = jax.block_until_ready(senet_forward(x, w1_t, w2_t, batch_tile=4))
    ref = jax.block_until_ready(senet_ref(x, w1_t, w2_t))

    assert out.shape == (B, C, H, W)
    assert jnp.allclose(out, ref, atol=1e-4, rtol=1e-4), "mismatch vs reference"
    print("KERNEL_OK")
</pallas_src>

<mosaic_0001>
module attributes {stable_mosaic.version = 11 : i64} {
  func.func @senet_kernel(%arg0: i32, %arg1: memref<4x128x256xf32, #tpu.memory_space<vmem>>, %arg2: memref<128x8xf32, #tpu.memory_space<vmem>>, %arg3: memref<8x128xf32, #tpu.memory_space<vmem>>, %arg4: memref<4x128x256xf32, #tpu.memory_space<vmem>>) attributes {dimension_semantics = [#tpu.dimension_semantics<parallel>], iteration_bounds = array<i64: 2>, scalar_prefetch = 0 : i64, scratch_operands = 0 : i64, tpu.core_type = #tpu.core_type<tc>, window_params = [{transform_indices = @transform_0, window_bounds = array<i64: 4, 128, 256>}, {pipeline_mode = #tpu.pipeline_mode<synchronous>, transform_indices = @transform_1, window_bounds = array<i64: 128, 8>}, {pipeline_mode = #tpu.pipeline_mode<synchronous>, transform_indices = @transform_2, window_bounds = array<i64: 8, 128>}, {transform_indices = @transform_3, window_bounds = array<i64: 4, 128, 256>}]} {
    %c0 = arith.constant 0 : index
    %c0_0 = arith.constant 0 : index
    %c0_1 = arith.constant 0 : index
    %0 = vector.load %arg1[%c0, %c0_0, %c0_1] : memref<4x128x256xf32, #tpu.memory_space<vmem>>, vector<4x128x256xf32>
    %cst = arith.constant dense<0.000000e+00> : vector<4x128xf32>
    %1 = vector.multi_reduction <add>, %0, %cst [2] : vector<4x128x256xf32> to vector<4x128xf32>
    %cst_2 = arith.constant 3.906250e-03 : f32
    %2 = vector.broadcast %cst_2 : f32 to vector<4x128xf32>
    %3 = arith.mulf %1, %2 : vector<4x128xf32>
    %c0_3 = arith.constant 0 : index
    %c0_4 = arith.constant 0 : index
    %4 = vector.load %arg2[%c0_3, %c0_4] : memref<128x8xf32, #tpu.memory_space<vmem>>, vector<128x8xf32>
    %cst_5 = arith.constant dense<0.000000e+00> : vector<4x8xf32>
    %5 = tpu.matmul %3, %4, %cst_5 {dimension_numbers = #tpu.dot_dimension_numbers<[1], [0], [0], [1], [0, 0, 1, 1], [], []>} : vector<4x128xf32>, vector<128x8xf32>, vector<4x8xf32> -> vector<4x8xf32>
    %cst_6 = arith.constant 0.000000e+00 : f32
    %6 = vector.broadcast %cst_6 : f32 to vector<4x8xf32>
    %7 = arith.maximumf %5, %6 : vector<4x8xf32>
    %c0_7 = arith.constant 0 : index
    %c0_8 = arith.constant 0 : index
    %8 = vector.load %arg3[%c0_7, %c0_8] : memref<8x128xf32, #tpu.memory_space<vmem>>, vector<8x128xf32>
    %cst_9 = arith.constant dense<0.000000e+00> : vector<4x128xf32>
    %9 = tpu.matmul %7, %8, %cst_9 {dimension_numbers = #tpu.dot_dimension_numbers<[1], [0], [0], [1], [0, 0, 1, 1], [], []>} : vector<4x8xf32>, vector<8x128xf32>, vector<4x128xf32> -> vector<4x128xf32>
    %10 = arith.negf %9 : vector<4x128xf32>
    %11 = math.exp %10 : vector<4x128xf32>
    %cst_10 = arith.constant 1.000000e+00 : f32
    %12 = vector.broadcast %cst_10 : f32 to vector<4x128xf32>
    %13 = arith.addf %12, %11 : vector<4x128xf32>
    %14 = arith.divf %12, %13 : vector<4x128xf32>
    %15 = vector.shape_cast %14 : vector<4x128xf32> to vector<4x128x1xf32>
    %c0_11 = arith.constant 0 : index
    %c0_12 = arith.constant 0 : index
    %c0_13 = arith.constant 0 : index
    %16 = vector.load %arg1[%c0_11, %c0_12, %c0_13] : memref<4x128x256xf32, #tpu.memory_space<vmem>>, vector<4x128x256xf32>
    %17 = vector.broadcast %15 : vector<4x128x1xf32> to vector<4x128x256xf32>
    %18 = arith.mulf %16, %17 : vector<4x128x256xf32>
    %c0_14 = arith.constant 0 : index
    %c0_15 = arith.constant 0 : index
    %c0_16 = arith.constant 0 : index
    %19 = vector.load %arg4[%c0_14, %c0_15, %c0_16] : memref<4x128x256xf32, #tpu.memory_space<vmem>>, vector<4x128x256xf32>
    tpu.vector_store %arg4[%c0_14, %c0_15, %c0_16], %18 {strides = array<i32>} : memref<4x128x256xf32, #tpu.memory_space<vmem>>, vector<4x128x256xf32>,
    return
  }
  func.func @transform_0(%arg0: i32) -> (i32, i32, i32) {
    %c0_i32 = arith.constant 0 : i32
    %c0_i32_0 = arith.constant 0 : i32
    %c0_i32_1 = arith.constant 0 : i32
    return %arg0, %c0_i32, %c0_i32_0 : i32, i32, i32
  }
  func.func @transform_1(%arg0: i32) -> (i32, i32) {
    %c0_i32 = arith.constant 0 : i32
    %c0_i32_0 = arith.constant 0 : i32
    %c0_i32_1 = arith.constant 0 : i32
    return %c0_i32, %c0_i32_0 : i32, i32
  }
  func.func @transform_2(%arg0: i32) -> (i32, i32) {
    %c0_i32 = arith.constant 0 : i32
    %c0_i32_0 = arith.constant 0 : i32
    %c0_i32_1 = arith.constant 0 : i32
    return %c0_i32, %c0_i32_0 : i32, i32
  }
  func.func @transform_3(%arg0: i32) -> (i32, i32, i32) {
    %c0_i32 = arith.constant 0 : i32
    %c0_i32_0 = arith.constant 0 : i32
    %c0_i32_1 = arith.constant 0 : i32
    return %arg0, %c0_i32, %c0_i32_0 : i32, i32, i32
  }
}

</mosaic_0001>

<llo_original>
// kernel: tpu_custom_call.1
$region0: #{tpu_custom_call.1}
  #allocation0 [shape = 'u32[]', space=smem, size = 0x4, offset = 0x4, fixed_abs, tag = 'smem constant byte address 0x4 - core index']
  #allocation1 [shape = 'u32[144,128]{1,0:T(1,128)}', space=vmem, size = 0x12000, scoped, tag = 'internal scratch']
  %s0 = inlined_call_operand.hbm [shape: f32[8,128,256], index: 0, kind: input, shape index: {}]
  %s1 = inlined_call_operand.vmem [shape: f32[128,8], index: 1, kind: input, shape index: {}]
  %s2 = inlined_call_operand.vmem [shape: f32[8,128], index: 2, kind: input, shape index: {}]
  %s3 = inlined_call_operand.hbm [shape: f32[8,128,256], index: 3, kind: output, shape index: {}]
  %s4 = sld [smem:[#allocation0]]
  $region49: #{tpu_custom_call.1} parent=0
    _
  %s6 = ssub.s32 1, %s4
  %s7 = scalar_select 0, %s6, %s4
  $region1: #{tpu_custom_call.1} parent=0
    #allocation2 [shape = 'u8[1048576]{0}', space=vmem, size = 0x100000, scoped, tag = 'input window, operand 0']
    #allocation3 [shape = 's32[2]{0}', space=sflag, size = 0x8, scoped, tag = 'scoped memory for tpu_custom_call.1']
    #allocation4 [shape = 's32[2]{0}', space=sflag, size = 0x8, scoped, tag = 'scoped memory for tpu_custom_call.1']
    #allocation5 [shape = 'u8[1048576]{0}', space=vmem, size = 0x100000, scoped, tag = 'output window, operand 0']
    %8 = vsyncpa [#allocation3], 0
    %s9 = scalar_lea.sflag [#allocation3], 1
    %10 = vsyncpa %s9, 0
    %11 = vsyncpa [#allocation4], 0
    %s12 = scalar_lea.sflag [#allocation4], 1
    %13 = vsyncpa %s12, 0
    loop: start=0, step=1, limit=4
    $region2: #{tpu_custom_call.1} parent=1 // loop_pre_header
      _
    $region3: #{tpu_custom_call.1} parent=1 // loop_header
      %s15 = sphi 0, %s19
      %p16 = scmp.ge.s32.totalorder %s15, 4
      %s25 = sphi 0, %s27
      %s28 = sphi 0, %s25
      %s29 = sphi 0, %s28
      %s45 = sphi 0, %s29
      %s49 = sphi 0, %s49
      %s51 = sphi 0, %s49
      %s52 = sphi 0, %s51
      %s66 = sphi 0, %s52
      %s70 = sphi 0, %s70
      %s72 = sphi 0, %s70
      %s73 = sphi 0, %s72
      %s87 = sphi 0, %s73
      %s93 = sphi 0, %s95
      %s96 = sphi 0, %s93
      %s97 = sphi 0, %s96
      %s113 = sphi 0, %s97
    $region4: #{tpu_custom_call.1} parent=1 // loop_header_branch
      %18 = sbr.rel (%p16) target = $region8
    $region5: #{tpu_custom_call.1} parent=1 // loop_body
      %s20 = ssub.s32 %s15, 1
      %s21 = ssub.s32 %s15, 2
      %s22 = sadd.s32 %s15, 1
      %s23 = ssub.s32 %s15, %s22
      %p24 = scmp.eq.s32.totalorder %s23, 0
      %s26 = sadd.s32 %s25, 1
      %s27 = scalar_select %p24, %s25, %s26
      %p30 = pneg %p24
      %p31 = scmp.eq.s32.totalorder %s15, 1
      %p32 = por %p30, %p31
      %p33 = scmp.ne.s32.totalorder %s25, %s28
      %p34 = scmp.eq.s32.totalorder %s15, 0
      %p35 = por %p33, %p34
      %p36 = scmp.ne.s32.totalorder %s25, %s28
      %p37 = scmp.eq.s32.totalorder %s20, 1
      %p38 = por %p36, %p37
      %p39 = scmp.ne.s32.totalorder %s28, %s29
      %p40 = scmp.eq.s32.totalorder %s20, 0
      %p41 = por %p39, %p40
      %p42 = scmp.ne.s32.totalorder %s28, %s29
      %p43 = scmp.eq.s32.totalorder %s21, 1
      %p44 = por %p42, %p43
      %p46 = scmp.ne.s32.totalorder %s29, %s45
      %p47 = scmp.eq.s32.totalorder %s21, 0
      %p48 = por %p46, %p47
      %s50 = sadd.s32 %s49, 1
      %p53 = scmp.eq.s32.totalorder %s15, 1
      %p54 = scmp.ne.s32.totalorder %s49, %s51
      %p55 = scmp.eq.s32.totalorder %s15, 0
      %p56 = por %p54, %p55
      %p57 = scmp.ne.s32.totalorder %s49, %s51
      %p58 = scmp.eq.s32.totalorder %s20, 1
      %p59 = por %p57, %p58
      %p60 = scmp.ne.s32.totalorder %s51, %s52
      %p61 = scmp.eq.s32.totalorder %s20, 0
      %p62 = por %p60, %p61
      %p63 = scmp.ne.s32.totalorder %s51, %s52
      %p64 = scmp.eq.s32.totalorder %s21, 1
      %p65 = por %p63, %p64
      %p67 = scmp.ne.s32.totalorder %s52, %s66
      %p68 = scmp.eq.s32.totalorder %s21, 0
      %p69 = por %p67, %p68
      %s71 = sadd.s32 %s70, 1
      %p74 = scmp.eq.s32.totalorder %s15, 1
      %p75 = scmp.ne.s32.totalorder %s70, %s72
      %p76 = scmp.eq.s32.totalorder %s15, 0
      %p77 = por %p75, %p76
      %p78 = scmp.ne.s32.totalorder %s70, %s72
      %p79 = scmp.eq.s32.totalorder %s20, 1
      %p80 = por %p78, %p79
      %p81 = scmp.ne.s32.totalorder %s72, %s73
      %p82 = scmp.eq.s32.totalorder %s20, 0
      %p83 = por %p81, %p82
      %p84 = scmp.ne.s32.totalorder %s72, %s73
      %p85 = scmp.eq.s32.totalorder %s21, 1
      %p86 = por %p84, %p85
      %p88 = scmp.ne.s32.totalorder %s73, %s87
      %p89 = scmp.eq.s32.totalorder %s21, 0
      %p90 = por %p88, %p89
      %s91 = ssub.s32 %s15, %s22
      %p92 = scmp.eq.s32.totalorder %s91, 0
      %s94 = sadd.s32 %s93, 1
      %s95 = scalar_select %p92, %s93, %s94
      %p98 = pneg %p92
      %p99 = scmp.eq.s32.totalorder %s15, 1
      %p100 = por %p98, %p99
      %p101 = scmp.ne.s32.totalorder %s93, %s96
      %p102 = scmp.eq.s32.totalorder %s15, 0
      %p103 = por %p101, %p102
      %p104 = scmp.ne.s32.totalorder %s93, %s96
      %p105 = scmp.eq.s32.totalorder %s20, 1
      %p106 = por %p104, %p105
      %p107 = scmp.ne.s32.totalorder %s96, %s97
      %p108 = scmp.eq.s32.totalorder %s20, 0
      %p109 = por %p107, %p108
      %p110 = scmp.ne.s32.totalorder %s96, %s97
      %p111 = scmp.eq.s32.totalorder %s21, 1
      %p112 = por %p110, %p111
      %p114 = scmp.ne.s32.totalorder %s97, %s113
      %p115 = scmp.eq.s32.totalorder %s21, 0
      %p116 = por %p114, %p115
      %p117 = scmp.le.s32.totalorder 1, %s15
      %p118 = scmp.lt.s32.totalorder %s15, 3
      %p119 = pnand %p117, %p118
      %p120 = pneg %p119
      // Predicated region
      $region9: #{tpu_custom_call.1} parent=5 // pred_check
        _
      $region10: #{tpu_custom_call.1} parent=5 // pred_check_branch
        %122 = sbr.rel (%p119) target = $region12
      $region11: #{tpu_custom_call.1} parent=5 // pred_region
        %s123 = ssub.s32 %s15, 1
        // Predicated region
        $region13: #{tpu_custom_call.1} parent=11 // pred_check
          %p124 = pneg %p62
        $region14: #{tpu_custom_call.1} parent=11 // pred_check_branch
          %126 = sbr.rel (%p124) target = $region16
        $region15: #{tpu_custom_call.1} parent=11 // pred_region
          _
        $region16: #{tpu_custom_call.1} parent=11 // pred_fallthru
          _
        // Predicated region
        $region17: #{tpu_custom_call.1} parent=11 // pred_check
          %p127 = pneg %p83
        $region18: #{tpu_custom_call.1} parent=11 // pred_check_branch
          %129 = sbr.rel (%p127) target = $region20
        $region19: #{tpu_custom_call.1} parent=11 // pred_region
          _
        $region20: #{tpu_custom_call.1} parent=11 // pred_fallthru
          _
      $region12: #{tpu_custom_call.1} parent=5 // pred_fallthru
        _
      %p130 = scmp.lt.s32.totalorder %s15, 2
      // Predicated region
      $region21: #{tpu_custom_call.1} parent=5 // pred_check
        %p131 = pneg %p130
      $region22: #{tpu_custom_call.1} parent=5 // pred_check_branch
        %133 = sbr.rel (%p131) target = $region24
      $region23: #{tpu_custom_call.1} parent=5 // pred_region
        // Predicated region
        $region25: #{tpu_custom_call.1} parent=23 // pred_check
          %p134 = pneg %p35
        $region26: #{tpu_custom_call.1} parent=23 // pred_check_branch
          %136 = sbr.rel (%p134) target = $region28
        $region27: #{tpu_custom_call.1} parent=23 // pred_region
          %s137 = sand.u32 %s25, 1
          %s138 = scalar_lea.sflag [#allocation3], %s137
          %s139 = sand.u32 %s25, 1
          %s140 = smul.addr %s139, 1024
          %s141 = scalar_lea.vmem [#allocation2], %s140
          %s142 = smul.u32 4, %s15
          %s144 = ssub.s32 16384, 16384
          %145 = vsyncadd %s138, %s144
          %s146 = smul.addr %s142, 32
          %s147 = smul.addr %s146, 128
          %s148 = scalar_lea.hbm %s0, %s147
          %s149 = sshll.u32 %s141, 4
          %s150 = int_to_ptr.vmem [resolvable:$true] %s149
          %155 = dma.hbm_to_vmem [thread:$0]  %s148, 16384, %s150, %s138, 256, 256, 16
        $region28: #{tpu_custom_call.1} parent=23 // pred_fallthru
          _
      $region24: #{tpu_custom_call.1} parent=5 // pred_fallthru
        _
      %p156 = scmp.le.s32.totalorder 1, %s15
      %p157 = scmp.lt.s32.totalorder %s15, 3
      %p158 = pnand %p156, %p157
      %p159 = pneg %p158
      // Predicated region
      $region29: #{tpu_custom_call.1} parent=5 // pred_check
        _
      $region30: #{tpu_custom_call.1} parent=5 // pred_check_branch
        %161 = sbr.rel (%p158) target = $region32
      $region31: #{tpu_custom_call.1} parent=5 // pred_region
        %s162 = ssub.s32 %s15, 1
        %s163 = sand.u32 %s28, 1
        %s164 = scalar_lea.sflag [#allocation3], %s163
        %s165 = sand.u32 %s28, 1
        %s166 = smul.addr %s165, 1024
        %s167 = scalar_lea.vmem [#allocation2], %s166
        // Predicated region
        $region33: #{tpu_custom_call.1} parent=31 // pred_check
          %p168 = pneg %p41
        $region34: #{tpu_custom_call.1} parent=31 // pred_check_branch
          %170 = sbr.rel (%p168) target = $region36
        $region35: #{tpu_custom_call.1} parent=31 // pred_region
          %171 = dma.done %s164, 16384
        $region36: #{tpu_custom_call.1} parent=31 // pred_fallthru
          _
        %s172 = sand.u32 %s28, 1
        %s173 = scalar_lea.sflag [#allocation3], %s172
        %s174 = sand.u32 %s28, 1
        %s175 = smul.addr %s174, 1024
        %s176 = scalar_lea.vmem [#allocation2], %s175
        %p177 = pneg %p41
        %p178 = pneg %p38
        %p179 = pneg %p62
        %p180 = pneg %p59
        %p181 = pneg %p83
        %p182 = pneg %p80
        %p183 = pneg %p109
        %p184 = pneg %p106
        %s185 = sand.u32 %s96, 1
        %s186 = scalar_lea.sflag [#allocation4], %s185
        %s187 = sand.u32 %s96, 1
        %s188 = smul.addr %s187, 1024
        %s189 = scalar_lea.vmem [#allocation5], %s188
        %s190 = smul.u32 4, %s20
        %s191 = smul.u32 4, %s20
        %v192 = vld [vmem:[%s167] sm:$0xff]
        %v193 = vld [vmem:[%s167 + $0x8] sm:$0xff]
        %v194 = vld [vmem:[%s167 + $0x10] sm:$0xff]
        %v195 = vld [vmem:[%s167 + $0x18] sm:$0xff]
        %v196 = vld [vmem:[%s167 + $0x20] sm:$0xff]
        %v197 = vld [vmem:[%s167 + $0x28] sm:$0xff]
        %v198 = vld [vmem:[%s167 + $0x30] sm:$0xff]
        %v199 = vld [vmem:[%s167 + $0x38] sm:$0xff]
        %v200 = vld [vmem:[%s167 + $0x40] sm:$0xff]
        %v201 = vld [vmem:[%s167 + $0x48] sm:$0xff]
        %v202 = vld [vmem:[%s167 + $0x50] sm:$0xff]
        %v203 = vld [vmem:[%s167 + $0x58] sm:$0xff]
        %v204 = vld [vmem:[%s167 + $0x60] sm:$0xff]
        %v205 = vld [vmem:[%s167 + $0x68] sm:$0xff]
        %v206 = vld [vmem:[%s167 + $0x70] sm:$0xff]
        %v207 = vld [vmem:[%s167 + $0x78] sm:$0xff]
        %v208 = vld [vmem:[%s167 + $0x80] sm:$0xff]
        %v209 = vld [vmem:[%s167 + $0x88] sm:$0xff]
        %v210 = vld [vmem:[%s167 + $0x90] sm:$0xff]
        %v211 = vld [vmem:[%s167 + $0x98] sm:$0xff]
        %v212 = vld [vmem:[%s167 + $0xa0] sm:$0xff]
        %v213 = vld [vmem:[%s167 + $0xa8] sm:$0xff]
        %v214 = vld [vmem:[%s167 + $0xb0] sm:$0xff]
        %v215 = vld [vmem:[%s167 + $0xb8] sm:$0xff]
        %v216 = vld [vmem:[%s167 + $0xc0] sm:$0xff]
        %v217 = vld [vmem:[%s167 + $0xc8] sm:$0xff]
        %v218 = vld [vmem:[%s167 + $0xd0] sm:$0xff]
        %v219 = vld [vmem:[%s167 + $0xd8] sm:$0xff]
        %v220 = vld [vmem:[%s167 + $0xe0] sm:$0xff]
        %v221 = vld [vmem:[%s167 + $0xe8] sm:$0xff]
        %v222 = vld [vmem:[%s167 + $0xf0] sm:$0xff]
        %v223 = vld [vmem:[%s167 + $0xf8] sm:$0xff]
        %v224 = vld [vmem:[%s167 + $0x100] sm:$0xff]
        %v225 = vld [vmem:[%s167 + $0x108] sm:$0xff]
        %v226 = vld [vmem:[%s167 + $0x110] sm:$0xff]
        %v227 = vld [vmem:[%s167 + $0x118] sm:$0xff]
        %v228 = vld [vmem:[%s167 + $0x120] sm:$0xff]
        %v229 = vld [vmem:[%s167 + $0x128] sm:$0xff]
        %v230 = vld [vmem:[%s167 + $0x130] sm:$0xff]
        %v231 = vld [vmem:[%s167 + $0x138] sm:$0xff]
        %v232 = vld [vmem:[%s167 + $0x140] sm:$0xff]
        %v233 = vld [vmem:[%s167 + $0x148] sm:$0xff]
        %v234 = vld [vmem:[%s167 + $0x150] sm:$0xff]
        %v235 = vld [vmem:[%s167 + $0x158] sm:$0xff]
        %v236 = vld [vmem:[%s167 + $0x160] sm:$0xff]
        %v237 = vld [vmem:[%s167 + $0x168] sm:$0xff]
        %v238 = vld [vmem:[%s167 + $0x170] sm:$0xff]
        %v239 = vld [vmem:[%s167 + $0x178] sm:$0xff]
        %v240 = vld [vmem:[%s167 + $0x180] sm:$0xff]
        %v241 = vld [vmem:[%s167 + $0x188] sm:$0xff]
        %v242 = vld [vmem:[%s167 + $0x190] sm:$0xff]
        %v243 = vld [vmem:[%s167 + $0x198] sm:$0xff]
        %v244 = vld [vmem:[%s167 + $0x1a0] sm:$0xff]
        %v245 = vld [vmem:[%s167 + $0x1a8] sm:$0xff]
        %v246 = vld [vmem:[%s167 + $0x1b0] sm:$0xff]
        %v247 = vld [vmem:[%s167 + $0x1b8] sm:$0xff]
        %v248 = vld [vmem:[%s167 + $0x1c0] sm:$0xff]
        %v249 = vld [vmem:[%s167 + $0x1c8] sm:$0xff]
        %v250 = vld [vmem:[%s167 + $0x1d0] sm:$0xff]
        %v251 = vld [vmem:[%s167 + $0x1d8] sm:$0xff]
        %v252 = vld [vmem:[%s167 + $0x1e0] sm:$0xff]
        %v253 = vld [vmem:[%s167 + $0x1e8] sm:$0xff]
        %v254 = vld [vmem:[%s167 + $0x1f0] sm:$0xff]
        %v255 = vld [vmem:[%s167 + $0x1f8] sm:$0xff]
        %v256 = vld [vmem:[%s167 + $0x200] sm:$0xff]
        %v257 = vld [vmem:[%s167 + $0x208] sm:$0xff]
        %v258 = vld [vmem:[%s167 + $0x210] sm:$0xff]
        %v259 = vld [vmem:[%s167 + $0x218] sm:$0xff]
        %v260 = vld [vmem:[%s167 + $0x220] sm:$0xff]
        %v261 = vld [vmem:[%s167 + $0x228] sm:$0xff]
        %v262 = vld [vmem:[%s167 + $0x230] sm:$0xff]
        %v263 = vld [vmem:[%s167 + $0x238] sm:$0xff]
        %v264 = vld [vmem:[%s167 + $0x240] sm:$0xff]
        %v265 = vld [vmem:[%s167 + $0x248] sm:$0xff]
        %v266 = vld [vmem:[%s167 + $0x250] sm:$0xff]
        %v267 = vld [vmem:[%s167 + $0x258] sm:$0xff]
        %v268 = vld [vmem:[%s167 + $0x260] sm:$0xff]
        %v269 = vld [vmem:[%s167 + $0x268] sm:$0xff]
        %v270 = vld [vmem:[%s167 + $0x270] sm:$0xff]
        %v271 = vld [vmem:[%s167 + $0x278] sm:$0xff]
        %v272 = vld [vmem:[%s167 + $0x280] sm:$0xff]
        %v273 = vld [vmem:[%s167 + $0x288] sm:$0xff]
        %v274 = vld [vmem:[%s167 + $0x290] sm:$0xff]
        %v275 = vld [vmem:[%s167 + $0x298] sm:$0xff]
        %v276 = vld [vmem:[%s167 + $0x2a0] sm:$0xff]
        %v277 = vld [vmem:[%s167 + $0x2a8] sm:$0xff]
        %v278 = vld [vmem:[%s167 + $0x2b0] sm:$0xff]
        %v279 = vld [vmem:[%s167 + $0x2b8] sm:$0xff]
        %v280 = vld [vmem:[%s167 + $0x2c0] sm:$0xff]
        %v281 = vld [vmem:[%s167 + $0x2c8] sm:$0xff]
        %v282 = vld [vmem:[%s167 + $0x2d0] sm:$0xff]
        %v283 = vld [vmem:[%s167 + $0x2d8] sm:$0xff]
        %v284 = vld [vmem:[%s167 + $0x2e0] sm:$0xff]
        %v285 = vld [vmem:[%s167 + $0x2e8] sm:$0xff]
        %v286 = vld [vmem:[%s167 + $0x2f0] sm:$0xff]
        %v287 = vld [vmem:[%s167 + $0x2f8] sm:$0xff]
        %v288 = vld [vmem:[%s167 + $0x300] sm:$0xff]
        %v289 = vld [vmem:[%s167 + $0x308] sm:$0xff]
        %v290 = vld [vmem:[%s167 + $0x310] sm:$0xff]
        %v291 = vld [vmem:[%s167 + $0x318] sm:$0xff]
        %v292 = vld [vmem:[%s167 + $0x320] sm:$0xff]
        %v293 = vld [vmem:[%s167 + $0x328] sm:$0xff]
        %v294 = vld [vmem:[%s167 + $0x330] sm:$0xff]
        %v295 = vld [vmem:[%s167 + $0x338] sm:$0xff]
        %v296 = vld [vmem:[%s167 + $0x340] sm:$0xff]
        %v297 = vld [vmem:[%s167 + $0x348] sm:$0xff]
        %v298 = vld [vmem:[%s167 + $0x350] sm:$0xff]
        %v299 = vld [vmem:[%s167 + $0x358] sm:$0xff]
        %v300 = vld [vmem:[%s167 + $0x360] sm:$0xff]
        %v301 = vld [vmem:[%s167 + $0x368] sm:$0xff]
        %v302 = vld [vmem:[%s167 + $0x370] sm:$0xff]
        %v303 = vld [vmem:[%s167 + $0x378] sm:$0xff]
        %v304 = vld [vmem:[%s167 + $0x380] sm:$0xff]
        %v305 = vld [vmem:[%s167 + $0x388] sm:$0xff]
        %v306 = vld [vmem:[%s167 + $0x390] sm:$0xff]
        %v307 = vld [vmem:[%s167 + $0x398] sm:$0xff]
        %v308 = vld [vmem:[%s167 + $0x3a0] sm:$0xff]
        %v309 = vld [vmem:[%s167 + $0x3a8] sm:$0xff]
        %v310 = vld [vmem:[%s167 + $0x3b0] sm:$0xff]
        %v311 = vld [vmem:[%s167 + $0x3b8] sm:$0xff]
        %v312 = vld [vmem:[%s167 + $0x3c0] sm:$0xff]
        %v313 = vld [vmem:[%s167 + $0x3c8] sm:$0xff]
        %v314 = vld [vmem:[%s167 + $0x3d0] sm:$0xff]
        %v315 = vld [vmem:[%s167 + $0x3d8] sm:$0xff]
        %v316 = vld [vmem:[%s167 + $0x3e0] sm:$0xff]
        %v317 = vld [vmem:[%s167 + $0x3e8] sm:$0xff]
        %v318 = vld [vmem:[%s167 + $0x3f0] sm:$0xff]
        %v319 = vld [vmem:[%s167 + $0x3f8] sm:$0xff]
        %v320 = vadd.f32 %v192, %v193
        %321 = vadd.xlane.f32.xlu0 %v320
        %v322 = vpop.xlane.xlu0 %321
        %v323 = vadd.f32 %v194, %v195
        %324 = vadd.xlane.f32.xlu0 %v323
        %v325 = vpop.xlane.xlu0 %324
        %v326 = vadd.f32 %v196, %v197
        %327 = vadd.xlane.f32.xlu0 %v326
        %v328 = vpop.xlane.xlu0 %327
        %v329 = vadd.f32 %v198, %v199
        %330 = vadd.xlane.f32.xlu0 %v329
        %v331 = vpop.xlane.xlu0 %330
        %v332 = vadd.f32 %v200, %v201
        %333 = vadd.xlane.f32.xlu0 %v332
        %v334 = vpop.xlane.xlu0 %333
        %v335 = vadd.f32 %v202, %v203
        %336 = vadd.xlane.f32.xlu0 %v335
        %v337 = vpop.xlane.xlu0 %336
        %v338 = vadd.f32 %v204, %v205
        %339 = vadd.xlane.f32.xlu0 %v338
        %v340 = vpop.xlane.xlu0 %339
        %v341 = vadd.f32 %v206, %v207
        %342 = vadd.xlane.f32.xlu0 %v341
        %v343 = vpop.xlane.xlu0 %342
        %v344 = vadd.f32 %v208, %v209
        %345 = vadd.xlane.f32.xlu0 %v344
        %v346 = vpop.xlane.xlu0 %345
        %v347 = vadd.f32 %v210, %v211
        %348 = vadd.xlane.f32.xlu0 %v347
        %v349 = vpop.xlane.xlu0 %348
        %v350 = vadd.f32 %v212, %v213
        %351 = vadd.xlane.f32.xlu0 %v350
        %v352 = vpop.xlane.xlu0 %351
        %v353 = vadd.f32 %v214, %v215
        %354 = vadd.xlane.f32.xlu0 %v353
        %v355 = vpop.xlane.xlu0 %354
        %v356 = vadd.f32 %v216, %v217
        %357 = vadd.xlane.f32.xlu0 %v356
        %v358 = vpop.xlane.xlu0 %357
        %v359 = vadd.f32 %v218, %v219
        %360 = vadd.xlane.f32.xlu0 %v359
        %v361 = vpop.xlane.xlu0 %360
        %v362 = vadd.f32 %v220, %v221
        %363 = vadd.xlane.f32.xlu0 %v362
        %v364 = vpop.xlane.xlu0 %363
        %v365 = vadd.f32 %v222, %v223
        %366 = vadd.xlane.f32.xlu0 %v365
        %v367 = vpop.xlane.xlu0 %366
        %v368 = vadd.f32 %v224, %v225
        %369 = vadd.xlane.f32.xlu0 %v368
        %v370 = vpop.xlane.xlu0 %369
        %v371 = vadd.f32 %v226, %v227
        %372 = vadd.xlane.f32.xlu0 %v371
        %v373 = vpop.xlane.xlu0 %372
        %v374 = vadd.f32 %v228, %v229
        %375 = vadd.xlane.f32.xlu0 %v374
        %v376 = vpop.xlane.xlu0 %375
        %v377 = vadd.f32 %v230, %v231
        %378 = vadd.xlane.f32.xlu0 %v377
        %v379 = vpop.xlane.xlu0 %378
        %v380 = vadd.f32 %v232, %v233
        %381 = vadd.xlane.f32.xlu0 %v380
        %v382 = vpop.xlane.xlu0 %381
        %v383 = vadd.f32 %v234, %v235
        %384 = vadd.xlane.f32.xlu0 %v383
        %v385 = vpop.xlane.xlu0 %384
        %v386 = vadd.f32 %v236, %v237
        %387 = vadd.xlane.f32.xlu0 %v386
        %v388 = vpop.xlane.xlu0 %387
        %v389 = vadd.f32 %v238, %v239
        %390 = vadd.xlane.f32.xlu0 %v389
        %v391 = vpop.xlane.xlu0 %390
        %v392 = vadd.f32 %v240, %v241
        %393 = vadd.xlane.f32.xlu0 %v392
        %v394 = vpop.xlane.xlu0 %393
        %v395 = vadd.f32 %v242, %v243
        %396 = vadd.xlane.f32.xlu0 %v395
        %v397 = vpop.xlane.xlu0 %396
        %v398 = vadd.f32 %v244, %v245
        %399 = vadd.xlane.f32.xlu0 %v398
        %v400 = vpop.xlane.xlu0 %399
        %v401 = vadd.f32 %v246, %v247
        %402 = vadd.xlane.f32.xlu0 %v401
        %v403 = vpop.xlane.xlu0 %402
        %v404 = vadd.f32 %v248, %v249
        %405 = vadd.xlane.f32.xlu0 %v404
        %v406 = vpop.xlane.xlu0 %405
        %v407 = vadd.f32 %v250, %v251
        %408 = vadd.xlane.f32.xlu0 %v407
        %v409 = vpop.xlane.xlu0 %408
        %v410 = vadd.f32 %v252, %v253
        %411 = vadd.xlane.f32.xlu0 %v410
        %v412 = vpop.xlane.xlu0 %411
        %v413 = vadd.f32 %v254, %v255
        %414 = vadd.xlane.f32.xlu0 %v413
        %v415 = vpop.xlane.xlu0 %414
        %v416 = vadd.f32 %v256, %v257
        %417 = vadd.xlane.f32.xlu0 %v416
        %v418 = vpop.xlane.xlu0 %417
        %v419 = vadd.f32 %v258, %v259
        %420 = vadd.xlane.f32.xlu0 %v419
        %v421 = vpop.xlane.xlu0 %420
        %v422 = vadd.f32 %v260, %v261
        %423 = vadd.xlane.f32.xlu0 %v422
        %v424 = vpop.xlane.xlu0 %423
        %v425 = vadd.f32 %v262, %v263
        %426 = vadd.xlane.f32.xlu0 %v425
        %v427 = vpop.xlane.xlu0 %426
        %v428 = vadd.f32 %v264, %v265
        %429 = vadd.xlane.f32.xlu0 %v428
        %v430 = vpop.xlane.xlu0 %429
        %v431 = vadd.f32 %v266, %v267
        %432 = vadd.xlane.f32.xlu0 %v431
        %v433 = vpop.xlane.xlu0 %432
        %v434 = vadd.f32 %v268, %v269
        %435 = vadd.xlane.f32.xlu0 %v434
        %v436 = vpop.xlane.xlu0 %435
        %v437 = vadd.f32 %v270, %v271
        %438 = vadd.xlane.f32.xlu0 %v437
        %v439 = vpop.xlane.xlu0 %438
        %v440 = vadd.f32 %v272, %v273
        %441 = vadd.xlane.f32.xlu0 %v440
        %v442 = vpop.xlane.xlu0 %441
        %v443 = vadd.f32 %v274, %v275
        %444 = vadd.xlane.f32.xlu0 %v443
        %v445 = vpop.xlane.xlu0 %444
        %v446 = vadd.f32 %v276, %v277
        %447 = vadd.xlane.f32.xlu0 %v446
        %v448 = vpop.xlane.xlu0 %447
        %v449 = vadd.f32 %v278, %v279
        %450 = vadd.xlane.f32.xlu0 %v449
        %v451 = vpop.xlane.xlu0 %450
        %v452 = vadd.f32 %v280, %v281
        %453 = vadd.xlane.f32.xlu0 %v452
        %v454 = vpop.xlane.xlu0 %453
        %v455 = vadd.f32 %v282, %v283
        %456 = vadd.xlane.f32.xlu0 %v455
        %v457 = vpop.xlane.xlu0 %456
        %v458 = vadd.f32 %v284, %v285
        %459 = vadd.xlane.f32.xlu0 %v458
        %v460 = vpop.xlane.xlu0 %459
        %v461 = vadd.f32 %v286, %v287
        %462 = vadd.xlane.f32.xlu0 %v461
        %v463 = vpop.xlane.xlu0 %462
        %v464 = vadd.f32 %v288, %v289
        %465 = vadd.xlane.f32.xlu0 %v464
        %v466 = vpop.xlane.xlu0 %465
        %v467 = vadd.f32 %v290, %v291
        %468 = vadd.xlane.f32.xlu0 %v467
        %v469 = vpop.xlane.xlu0 %468
        %v470 = vadd.f32 %v292, %v293
        %471 = vadd.xlane.f32.xlu0 %v470
        %v472 = vpop.xlane.xlu0 %471
        %v473 = vadd.f32 %v294, %v295
        %474 = vadd.xlane.f32.xlu0 %v473
        %v475 = vpop.xlane.xlu0 %474
        %v476 = vadd.f32 %v296, %v297
        %477 = vadd.xlane.f32.xlu0 %v476
        %v478 = vpop.xlane.xlu0 %477
        %v479 = vadd.f32 %v298, %v299
        %480 = vadd.xlane.f32.xlu0 %v479
        %v481 = vpop.xlane.xlu0 %480
        %v482 = vadd.f32 %v300, %v301
        %483 = vadd.xlane.f32.xlu0 %v482
        %v484 = vpop.xlane.xlu0 %483
        %v485 = vadd.f32 %v302, %v303
        %486 = vadd.xlane.f32.xlu0 %v485
        %v487 = vpop.xlane.xlu0 %486
        %v488 = vadd.f32 %v304, %v305
        %489 = vadd.xlane.f32.xlu0 %v488
        %v490 = vpop.xlane.xlu0 %489
        %v491 = vadd.f32 %v306, %v307
        %492 = vadd.xlane.f32.xlu0 %v491
        %v493 = vpop.xlane.xlu0 %492
        %v494 = vadd.f32 %v308, %v309
        %495 = vadd.xlane.f32.xlu0 %v494
        %v496 = vpop.xlane.xlu0 %495
        %v497 = vadd.f32 %v310, %v311
        %498 = vadd.xlane.f32.xlu0 %v497
        %v499 = vpop.xlane.xlu0 %498
        %v500 = vadd.f32 %v312, %v313
        %501 = vadd.xlane.f32.xlu0 %v500
        %v502 = vpop.xlane.xlu0 %501
        %v503 = vadd.f32 %v314, %v315
        %504 = vadd.xlane.f32.xlu0 %v503
        %v505 = vpop.xlane.xlu0 %504
        %v506 = vadd.f32 %v316, %v317
        %507 = vadd.xlane.f32.xlu0 %v506
        %v508 = vpop.xlane.xlu0 %507
        %v509 = vadd.f32 %v318, %v319
        %510 = vadd.xlane.f32.xlu0 %v509
        %v511 = vpop.xlane.xlu0 %510
        %v512 = vmul.f32 %v322, 0.00390625
        %v513 = vmul.f32 %v325, 0.00390625
        %v514 = vmul.f32 %v328, 0.00390625
        %v515 = vmul.f32 %v331, 0.00390625
        %v516 = vmul.f32 %v334, 0.00390625
        %v517 = vmul.f32 %v337, 0.00390625
        %v518 = vmul.f32 %v340, 0.00390625
        %v519 = vmul.f32 %v343, 0.00390625
        %v520 = vmul.f32 %v346, 0.00390625
        %v521 = vmul.f32 %v349, 0.00390625
        %v522 = vmul.f32 %v352, 0.00390625
        %v523 = vmul.f32 %v355, 0.00390625
        %v524 = vmul.f32 %v358, 0.00390625
        %v525 = vmul.f32 %v361, 0.00390625
        %v526 = vmul.f32 %v364, 0.00390625
        %v527 = vmul.f32 %v367, 0.00390625
        %v528 = vmul.f32 %v370, 0.00390625
        %v529 = vmul.f32 %v373, 0.00390625
        %v530 = vmul.f32 %v376, 0.00390625
        %v531 = vmul.f32 %v379, 0.00390625
        %v532 = vmul.f32 %v382, 0.00390625
        %v533 = vmul.f32 %v385, 0.00390625
        %v534 = vmul.f32 %v388, 0.00390625
        %v535 = vmul.f32 %v391, 0.00390625
        %v536 = vmul.f32 %v394, 0.00390625
        %v537 = vmul.f32 %v397, 0.00390625
        %v538 = vmul.f32 %v400, 0.00390625
        %v539 = vmul.f32 %v403, 0.00390625
        %v540 = vmul.f32 %v406, 0.00390625
        %v541 = vmul.f32 %v409, 0.00390625
        %v542 = vmul.f32 %v412, 0.00390625
        %v543 = vmul.f32 %v415, 0.00390625
        %v544 = vmul.f32 %v418, 0.00390625
        %v545 = vmul.f32 %v421, 0.00390625
        %v546 = vmul.f32 %v424, 0.00390625
        %v547 = vmul.f32 %v427, 0.00390625
        %v548 = vmul.f32 %v430, 0.00390625
        %v549 = vmul.f32 %v433, 0.00390625
        %v550 = vmul.f32 %v436, 0.00390625
        %v551 = vmul.f32 %v439, 0.00390625
        %v552 = vmul.f32 %v442, 0.00390625
        %v553 = vmul.f32 %v445, 0.00390625
        %v554 = vmul.f32 %v448, 0.00390625
        %v555 = vmul.f32 %v451, 0.00390625
        %v556 = vmul.f32 %v454, 0.00390625
        %v557 = vmul.f32 %v457, 0.00390625
        %v558 = vmul.f32 %v460, 0.00390625
        %v559 = vmul.f32 %v463, 0.00390625
        %v560 = vmul.f32 %v466, 0.00390625
        %v561 = vmul.f32 %v469, 0.00390625
        %v562 = vmul.f32 %v472, 0.00390625
        %v563 = vmul.f32 %v475, 0.00390625
        %v564 = vmul.f32 %v478, 0.00390625
        %v565 = vmul.f32 %v481, 0.00390625
        %v566 = vmul.f32 %v484, 0.00390625
        %v567 = vmul.f32 %v487, 0.00390625
        %v568 = vmul.f32 %v490, 0.00390625
        %v569 = vmul.f32 %v493, 0.00390625
        %v570 = vmul.f32 %v496, 0.00390625
        %v571 = vmul.f32 %v499, 0.00390625
        %v572 = vmul.f32 %v502, 0.00390625
        %v573 = vmul.f32 %v505, 0.00390625
        %v574 = vmul.f32 %v508, 0.00390625
        %v575 = vmul.f32 %v511, 0.00390625
        %v576 = vld [vmem:[%s1] sm:$0xff]
        %v577 = vld [vmem:[%s1 + $0x8] sm:$0xff]
        %v578 = vld [vmem:[%s1 + $0x10] sm:$0xff]
        %v579 = vld [vmem:[%s1 + $0x18] sm:$0xff]
        %v580 = vld [vmem:[%s1 + $0x20] sm:$0xff]
        %v581 = vld [vmem:[%s1 + $0x28] sm:$0xff]
        %v582 = vld [vmem:[%s1 + $0x30] sm:$0xff]
        %v583 = vld [vmem:[%s1 + $0x38] sm:$0xff]
        %v584 = vld [vmem:[%s1 + $0x40] sm:$0xff]
        %v585 = vld [vmem:[%s1 + $0x48] sm:$0xff]
        %v586 = vld [vmem:[%s1 + $0x50] sm:$0xff]
        %v587 = vld [vmem:[%s1 + $0x58] sm:$0xff]
        %v588 = vld [vmem:[%s1 + $0x60] sm:$0xff]
        %v589 = vld [vmem:[%s1 + $0x68] sm:$0xff]
        %v590 = vld [vmem:[%s1 + $0x70] sm:$0xff]
        %v591 = vld [vmem:[%s1 + $0x78] sm:$0xff]
        %v656 = vlaneseq
        %v657 = vand.u32 %v656, 127
        %v658 = vlaneseq
        %v659 = vshrl.u32 %v658, 7
        %v660 = vsub.s32 %v657, %v659
        %v661 = vrot.slane %v512, %v660
        %v662 = vadd.s32 %v657, 4294967288
        %v663 = vlaneseq
        %v664 = vshrl.u32 %v663, 7
        %v665 = vsub.s32 %v662, %v664
        %v666 = vrot.slane %v513, %v665
        %vm667 = vcmask 130112
        %v668 = vsel %vm667, %v666, %v661
        %v669 = vadd.s32 %v657, 4294967280
        %v670 = vlaneseq
        %v671 = vshrl.u32 %v670, 7
        %v672 = vsub.s32 %v669, %v671
        %v673 = vrot.slane %v514, %v672
        %vm674 = vcmask 195712
        %v675 = vsel %vm674, %v673, %v668
        %v676 = vadd.s32 %v657, 4294967272
        %v677 = vlaneseq
        %v678 = vshrl.u32 %v677, 7
        %v679 = vsub.s32 %v676, %v678
        %v680 = vrot.slane %v515, %v679
        %vm681 = vcmask 261312
        %v682 = vsel %vm681, %v680, %v675
        %v683 = vadd.s32 %v657, 4294967264
        %v684 = vlaneseq
        %v685 = vshrl.u32 %v684, 7
        %v686 = vsub.s32 %v683, %v685
        %v687 = vrot.slane %v516, %v686
        %vm688 = vcmask 326912
        %v689 = vsel %vm688, %v687, %v682
        %v690 = vadd.s32 %v657, 4294967256
        %v691 = vlaneseq
        %v692 = vshrl.u32 %v691, 7
        %v693 = vsub.s32 %v690, %v692
        %v694 = vrot.slane %v517, %v693
        %vm695 = vcmask 392512
        %v696 = vsel %vm695, %v694, %v689
        %v697 = vadd.s32 %v657, 4294967248
        %v698 = vlaneseq
        %v699 = vshrl.u32 %v698, 7
        %v700 = vsub.s32 %v697, %v699
        %v701 = vrot.slane %v518, %v700
        %vm702 = vcmask 458112
        %v703 = vsel %vm702, %v701, %v696
        %v704 = vadd.s32 %v657, 4294967240
        %v705 = vlaneseq
        %v706 = vshrl.u32 %v705, 7
        %v707 = vsub.s32 %v704, %v706
        %v708 = vrot.slane %v519, %v707
        %vm709 = vcmask 523712
        %v710 = vsel %vm709, %v708, %v703
        %v711 = vadd.s32 %v657, 4294967232
        %v712 = vlaneseq
        %v713 = vshrl.u32 %v712, 7
        %v714 = vsub.s32 %v711, %v713
        %v715 = vrot.slane %v520, %v714
        %vm716 = vcmask 589312
        %v717 = vsel %vm716, %v715, %v710
        %v718 = vadd.s32 %v657, 4294967224
        %v719 = vlaneseq
        %v720 = vshrl.u32 %v719, 7
        %v721 = vsub.s32 %v718, %v720
        %v722 = vrot.slane %v521, %v721
        %vm723 = vcmask 654912
        %v724 = vsel %vm723, %v722, %v717
        %v725 = vadd.s32 %v657, 4294967216
        %v726 = vlaneseq
        %v727 = vshrl.u32 %v726, 7
        %v728 = vsub.s32 %v725, %v727
        %v729 = vrot.slane %v522, %v728
        %vm730 = vcmask 720512
        %v731 = vsel %vm730, %v729, %v724
        %v732 = vadd.s32 %v657, 4294967208
        %v733 = vlaneseq
        %v734 = vshrl.u32 %v733, 7
        %v735 = vsub.s32 %v732, %v734
        %v736 = vrot.slane %v523, %v735
        %vm737 = vcmask 786112
        %v738 = vsel %vm737, %v736, %v731
        %v739 = vadd.s32 %v657, 4294967200
        %v740 = vlaneseq
        %v741 = vshrl.u32 %v740, 7
        %v742 = vsub.s32 %v739, %v741
        %v743 = vrot.slane %v524, %v742
        %vm744 = vcmask 851712
        %v745 = vsel %vm744, %v743, %v738
        %v746 = vadd.s32 %v657, 4294967192
        %v747 = vlaneseq
        %v748 = vshrl.u32 %v747, 7
        %v749 = vsub.s32 %v746, %v748
        %v750 = vrot.slane %v525, %v749
        %vm751 = vcmask 917312
        %v752 = vsel %vm751, %v750, %v745
        %v753 = vadd.s32 %v657, 4294967184
        %v754 = vlaneseq
        %v755 = vshrl.u32 %v754, 7
        %v756 = vsub.s32 %v753, %v755
        %v757 = vrot.slane %v526, %v756
        %vm758 = vcmask 982912
        %v759 = vsel %vm758, %v757, %v752
        %v760 = vadd.s32 %v657, 4294967176
        %v761 = vlaneseq
        %v762 = vshrl.u32 %v761, 7
        %v763 = vsub.s32 %v760, %v762
        %v764 = vrot.slane %v527, %v763
        %vm765 = vcmask 1048512
        %v766 = vsel %vm765, %v764, %v759
        %v767 = vlaneseq
        %v768 = vshrl.u32 %v767, 7
        %v769 = vsub.s32 %v657, %v768
        %v770 = vrot.slane %v528, %v769
        %v771 = vlaneseq
        %v772 = vshrl.u32 %v771, 7
        %v773 = vsub.s32 %v662, %v772
        %v774 = vrot.slane %v529, %v773
        %v775 = vsel %vm667, %v774, %v770
        %v776 = vlaneseq
        %v777 = vshrl.u32 %v776, 7
        %v778 = vsub.s32 %v669, %v777
        %v779 = vrot.slane %v530, %v778
        %v780 = vsel %vm674, %v779, %v775
        %v781 = vlaneseq
        %v782 = vshrl.u32 %v781, 7
        %v783 = vsub.s32 %v676, %v782
        %v784 = vrot.slane %v531, %v783
        %v785 = vsel %vm681, %v784, %v780
        %v786 = vlaneseq
        %v787 = vshrl.u32 %v786, 7
        %v788 = vsub.s32 %v683, %v787
        %v789 = vrot.slane %v532, %v788
        %v790 = vsel %vm688, %v789, %v785
        %v791 = vlaneseq
        %v792 = vshrl.u32 %v791, 7
        %v793 = vsub.s32 %v690, %v792
        %v794 = vrot.slane %v533, %v793
        %v795 = vsel %vm695, %v794, %v790
        %v796 = vlaneseq
        %v797 = vshrl.u32 %v796, 7
        %v798 = vsub.s32 %v697, %v797
        %v799 = vrot.slane %v534, %v798
        %v800 = vsel %vm702, %v799, %v795
        %v801 = vlaneseq
        %v802 = vshrl.u32 %v801, 7
        %v803 = vsub.s32 %v704, %v802
        %v804 = vrot.slane %v535, %v803
        %v805 = vsel %vm709, %v804, %v800
        %v806 = vlaneseq
        %v807 = vshrl.u32 %v806, 7
        %v808 = vsub.s32 %v711, %v807
        %v809 = vrot.slane %v536, %v808
        %v810 = vsel %vm716, %v809, %v805
        %v811 = vlaneseq
        %v812 = vshrl.u32 %v811, 7
        %v813 = vsub.s32 %v718, %v812
        %v814 = vrot.slane %v537, %v813
        %v815 = vsel %vm723, %v814, %v810
        %v816 = vlaneseq
        %v817 = vshrl.u32 %v816, 7
        %v818 = vsub.s32 %v725, %v817
        %v819 = vrot.slane %v538, %v818
        %v820 = vsel %vm730, %v819, %v815
        %v821 = vlaneseq
        %v822 = vshrl.u32 %v821, 7
        %v823 = vsub.s32 %v732, %v822
        %v824 = vrot.slane %v539, %v823
        %v825 = vsel %vm737, %v824, %v820
        %v826 = vlaneseq
        %v827 = vshrl.u32 %v826, 7
        %v828 = vsub.s32 %v739, %v827
        %v829 = vrot.slane %v540, %v828
        %v830 = vsel %vm744, %v829, %v825
        %v831 = vlaneseq
        %v832 = vshrl.u32 %v831, 7
        %v833 = vsub.s32 %v746, %v832
        %v834 = vrot.slane %v541, %v833
        %v835 = vsel %vm751, %v834, %v830
        %v836 = vlaneseq
        %v837 = vshrl.u32 %v836, 7
        %v838 = vsub.s32 %v753, %v837
        %v839 = vrot.slane %v542, %v838
        %v840 = vsel %vm758, %v839, %v835
        %v841 = vlaneseq
        %v842 = vshrl.u32 %v841, 7
        %v843 = vsub.s32 %v760, %v842
        %v844 = vrot.slane %v543, %v843
        %v845 = vsel %vm765, %v844, %v840
        %v846 = vlaneseq
        %v847 = vshrl.u32 %v846, 7
        %v848 = vsub.s32 %v657, %v847
        %v849 = vrot.slane %v544, %v848
        %v850 = vlaneseq
        %v851 = vshrl.u32 %v850, 7
        %v852 = vsub.s32 %v662, %v851
        %v853 = vrot.slane %v545, %v852
        %v854 = vsel %vm667, %v853, %v849
        %v855 = vlaneseq
        %v856 = vshrl.u32 %v855, 7
        %v857 = vsub.s32 %v669, %v856
        %v858 = vrot.slane %v546, %v857
        %v859 = vsel %vm674, %v858, %v854
        %v860 = vlaneseq
        %v861 = vshrl.u32 %v860, 7
        %v862 = vsub.s32 %v676, %v861
        %v863 = vrot.slane %v547, %v862
        %v864 = vsel %vm681, %v863, %v859
        %v865 = vlaneseq
        %v866 = vshrl.u32 %v865, 7
        %v867 = vsub.s32 %v683, %v866
        %v868 = vrot.slane %v548, %v867
        %v869 = vsel %vm688, %v868, %v864
        %v870 = vlaneseq
        %v871 = vshrl.u32 %v870, 7
        %v872 = vsub.s32 %v690, %v871
        %v873 = vrot.slane %v549, %v872
        %v874 = vsel %vm695, %v873, %v869
        %v875 = vlaneseq
        %v876 = vshrl.u32 %v875, 7
        %v877 = vsub.s32 %v697, %v876
        %v878 = vrot.slane %v550, %v877
        %v879 = vsel %vm702, %v878, %v874
        %v880 = vlaneseq
        %v881 = vshrl.u32 %v880, 7
        %v882 = vsub.s32 %v704, %v881
        %v883 = vrot.slane %v551, %v882
        %v884 = vsel %vm709, %v883, %v879
        %v885 = vlaneseq
        %v886 = vshrl.u32 %v885, 7
        %v887 = vsub.s32 %v711, %v886
        %v888 = vrot.slane %v552, %v887
        %v889 = vsel %vm716, %v888, %v884
        %v890 = vlaneseq
        %v891 = vshrl.u32 %v890, 7
        %v892 = vsub.s32 %v718, %v891
        %v893 = vrot.slane %v553, %v892
        %v894 = vsel %vm723, %v893, %v889
        %v895 = vlaneseq
        %v896 = vshrl.u32 %v895, 7
        %v897 = vsub.s32 %v725, %v896
        %v898 = vrot.slane %v554, %v897
        %v899 = vsel %vm730, %v898, %v894
        %v900 = vlaneseq
        %v901 = vshrl.u32 %v900, 7
        %v902 = vsub.s32 %v732, %v901
        %v903 = vrot.slane %v555, %v902
        %v904 = vsel %vm737, %v903, %v899
        %v905 = vlaneseq
        %v906 = vshrl.u32 %v905, 7
        %v907 = vsub.s32 %v739, %v906
        %v908 = vrot.slane %v556, %v907
        %v909 = vsel %vm744, %v908, %v904
        %v910 = vlaneseq
        %v911 = vshrl.u32 %v910, 7
        %v912 = vsub.s32 %v746, %v911
        %v913 = vrot.slane %v557, %v912
        %v914 = vsel %vm751, %v913, %v909
        %v915 = vlaneseq
        %v916 = vshrl.u32 %v915, 7
        %v917 = vsub.s32 %v753, %v916
        %v918 = vrot.slane %v558, %v917
        %v919 = vsel %vm758, %v918, %v914
        %v920 = vlaneseq
        %v921 = vshrl.u32 %v920, 7
        %v922 = vsub.s32 %v760, %v921
        %v923 = vrot.slane %v559, %v922
        %v924 = vsel %vm765, %v923, %v919
        %v925 = vlaneseq
        %v926 = vshrl.u32 %v925, 7
        %v927 = vsub.s32 %v657, %v926
        %v928 = vrot.slane %v560, %v927
        %v929 = vlaneseq
        %v930 = vshrl.u32 %v929, 7
        %v931 = vsub.s32 %v662, %v930
        %v932 = vrot.slane %v561, %v931
        %v933 = vsel %vm667, %v932, %v928
        %v934 = vlaneseq
        %v935 = vshrl.u32 %v934, 7
        %v936 = vsub.s32 %v669, %v935
        %v937 = vrot.slane %v562, %v936
        %v938 = vsel %vm674, %v937, %v933
        %v939 = vlaneseq
        %v940 = vshrl.u32 %v939, 7
        %v941 = vsub.s32 %v676, %v940
        %v942 = vrot.slane %v563, %v941
        %v943 = vsel %vm681, %v942, %v938
        %v944 = vlaneseq
        %v945 = vshrl.u32 %v944, 7
        %v946 = vsub.s32 %v683, %v945
        %v947 = vrot.slane %v564, %v946
        %v948 = vsel %vm688, %v947, %v943
        %v949 = vlaneseq
        %v950 = vshrl.u32 %v949, 7
        %v951 = vsub.s32 %v690, %v950
        %v952 = vrot.slane %v565, %v951
        %v953 = vsel %vm695, %v952, %v948
        %v954 = vlaneseq
        %v955 = vshrl.u32 %v954, 7
        %v956 = vsub.s32 %v697, %v955
        %v957 = vrot.slane %v566, %v956
        %v958 = vsel %vm702, %v957, %v953
        %v959 = vlaneseq
        %v960 = vshrl.u32 %v959, 7
        %v961 = vsub.s32 %v704, %v960
        %v962 = vrot.slane %v567, %v961
        %v963 = vsel %vm709, %v962, %v958
        %v964 = vlaneseq
        %v965 = vshrl.u32 %v964, 7
        %v966 = vsub.s32 %v711, %v965
        %v967 = vrot.slane %v568, %v966
        %v968 = vsel %vm716, %v967, %v963
        %v969 = vlaneseq
        %v970 = vshrl.u32 %v969, 7
        %v971 = vsub.s32 %v718, %v970
        %v972 = vrot.slane %v569, %v971
        %v973 = vsel %vm723, %v972, %v968
        %v974 = vlaneseq
        %v975 = vshrl.u32 %v974, 7
        %v976 = vsub.s32 %v725, %v975
        %v977 = vrot.slane %v570, %v976
        %v978 = vsel %vm730, %v977, %v973
        %v979 = vlaneseq
        %v980 = vshrl.u32 %v979, 7
        %v981 = vsub.s32 %v732, %v980
        %v982 = vrot.slane %v571, %v981
        %v983 = vsel %vm737, %v982, %v978
        %v984 = vlaneseq
        %v985 = vshrl.u32 %v984, 7
        %v986 = vsub.s32 %v739, %v985
        %v987 = vrot.slane %v572, %v986
        %v988 = vsel %vm744, %v987, %v983
        %v989 = vlaneseq
        %v990 = vshrl.u32 %v989, 7
        %v991 = vsub.s32 %v746, %v990
        %v992 = vrot.slane %v573, %v991
        %v993 = vsel %vm751, %v992, %v988
        %v994 = vlaneseq
        %v995 = vshrl.u32 %v994, 7
        %v996 = vsub.s32 %v753, %v995
        %v997 = vrot.slane %v574, %v996
        %v998 = vsel %vm758, %v997, %v993
        %v999 = vlaneseq
        %v1000 = vshrl.u32 %v999, 7
        %v1001 = vsub.s32 %v760, %v1000
        %v1002 = vrot.slane %v575, %v1001
        %v1003 = vsel %vm765, %v1002, %v998
        %vm1004 = vcmask 1041409
        %v1005 = vsel %vm1004, %v845, %v766
        %vm1006 = vcmask 1042434
        %v1007 = vsel %vm1006, %v924, %v1005
        %vm1008 = vcmask 1043459
        %v1009 = vsel %vm1008, %v1003, %v1007
        %1011 = vmatprep.subr.mxu0 0.0
        %1012 = vmatpush1.msra.mxu0 %v576
        %1013 = vmatprep.subr.mxu0 0.0
        %1014 = vmatpush1.msra.mxu0 %v577
        %1015 = vmatprep.subr.mxu0 0.0
        %1016 = vmatpush1.msra.mxu0 %v578
        %1017 = vmatprep.subr.mxu0 0.0
        %1018 = vmatpush1.msra.mxu0 %v579
        %1019 = vmatprep.subr.mxu0 0.0
        %1020 = vmatpush1.msra.mxu0 %v580
        %1021 = vmatprep.subr.mxu0 0.0
        %1022 = vmatpush1.msra.mxu0 %v581
        %1023 = vmatprep.subr.mxu0 0.0
        %1024 = vmatpush1.msra.mxu0 %v582
        %1025 = vmatprep.subr.mxu0 0.0
        %1026 = vmatpush1.msra.mxu0 %v583
        %1027 = vmatprep.subr.mxu0 0.0
        %1028 = vmatpush1.msra.mxu0 %v584
        %1029 = vmatprep.subr.mxu0 0.0
        %1030 = vmatpush1.msra.mxu0 %v585
        %1031 = vmatprep.subr.mxu0 0.0
        %1032 = vmatpush1.msra.mxu0 %v586
        %1033 = vmatprep.subr.mxu0 0.0
        %1034 = vmatpush1.msra.mxu0 %v587
        %1035 = vmatprep.subr.mxu0 0.0
        %1036 = vmatpush1.msra.mxu0 %v588
        %1037 = vmatprep.subr.mxu0 0.0
        %1038 = vmatpush1.msra.mxu0 %v589
        %1039 = vmatprep.subr.mxu0 0.0
        %1040 = vmatpush1.msra.mxu0 %v590
        %1041 = vmatprep.subr.mxu0 0.0
        %1042 = vmatpush1.msra.mxu0 %v591
        %1043 = vmatprep.subr.mxu0 0.0
        %1044 = vmatpush1.msra.mxu0 0.0
        %1045 = vmatprep.subr.mxu0 0.0
        %1046 = vmatpush1.msra.mxu0 0.0
        %1047 = vmatprep.subr.mxu0 0.0
        %1048 = vmatpush1.msra.mxu0 0.0
        %1049 = vmatprep.subr.mxu0 0.0
        %1050 = vmatpush1.msra.mxu0 0.0
        %1051 = vmatprep.subr.mxu0 0.0
        %1052 = vmatpush1.msra.mxu0 0.0
        %1053 = vmatprep.subr.mxu0 0.0
        %1054 = vmatpush1.msra.mxu0 0.0
        %1055 = vmatprep.subr.mxu0 0.0
        %1056 = vmatpush1.msra.mxu0 0.0
        %1057 = vmatprep.subr.mxu0 0.0
        %1058 = vmatpush1.msra.mxu0 0.0
        %1059 = vmatprep.subr.mxu0 0.0
        %1060 = vmatpush1.msra.mxu0 0.0
        %1061 = vmatprep.subr.mxu0 0.0
        %1062 = vmatpush1.msra.mxu0 0.0
        %1063 = vmatprep.subr.mxu0 0.0
        %1064 = vmatpush1.msra.mxu0 0.0
        %1065 = vmatprep.subr.mxu0 0.0
        %1066 = vmatpush1.msra.mxu0 0.0
        %1067 = vmatprep.subr.mxu0 0.0
        %1068 = vmatpush1.msra.mxu0 0.0
        %1069 = vmatprep.subr.mxu0 0.0
        %1070 = vmatpush1.msra.mxu0 0.0
        %1071 = vmatprep.subr.mxu0 0.0
        %1072 = vmatpush1.msra.mxu0 0.0
        %1073 = vmatprep.subr.mxu0 0.0
        %1074 = vmatpush1.msra.mxu0 0.0
        %1075 = vmatprep.mubr.f32.mxu0 0.0
        %1076 = vmatmul.mubr.f32.gmra.mrb[0].mxu0 %v1009
        %v1077 = vpop.f32.mrb[0].mxu0
        %v1078 = vadd.f32 0.0, %v1077
        %v1079 = vpop.f32.mrb[0].mxu0
        %1080 = vdwg.mxu0
        %v1081 = vmax.f32 %v1078, 0.0
        %v1082 = vld [vmem:[%s2] sm:$0xff]
        %vm1083 = vcmask 64512
        %v1085 = vsel %vm1083, %v1081, 0
        %1087 = vmatprep.subr.mxu0 0.0
        %1088 = vmatpush1.msra.mxu0 %v1082
        %1089 = vmatprep.subr.mxu0 0.0
        %1090 = vmatpush1.msra.mxu0 0.0
        %1091 = vmatprep.subr.mxu0 0.0
        %1092 = vmatpush1.msra.mxu0 0.0
        %1093 = vmatprep.subr.mxu0 0.0
        %1094 = vmatpush1.msra.mxu0 0.0
        %1095 = vmatprep.subr.mxu0 0.0
        %1096 = vmatpush1.msra.mxu0 0.0
        %1097 = vmatprep.subr.mxu0 0.0
        %1098 = vmatpush1.msra.mxu0 0.0
        %1099 = vmatprep.subr.mxu0 0.0
        %1100 = vmatpush1.msra.mxu0 0.0
        %1101 = vmatprep.subr.mxu0 0.0
        %1102 = vmatpush1.msra.mxu0 0.0
        %1103 = vmatprep.subr.mxu0 0.0
        %1104 = vmatpush1.msra.mxu0 0.0
        %1105 = vmatprep.subr.mxu0 0.0
        %1106 = vmatpush1.msra.mxu0 0.0
        %1107 = vmatprep.subr.mxu0 0.0
        %1108 = vmatpush1.msra.mxu0 0.0
        %1109 = vmatprep.subr.mxu0 0.0
        %1110 = vmatpush1.msra.mxu0 0.0
        %1111 = vmatprep.subr.mxu0 0.0
        %1112 = vmatpush1.msra.mxu0 0.0
        %1113 = vmatprep.subr.mxu0 0.0
        %1114 = vmatpush1.msra.mxu0 0.0
        %1115 = vmatprep.subr.mxu0 0.0
        %1116 = vmatpush1.msra.mxu0 0.0
        %1117 = vmatprep.subr.mxu0 0.0
        %1118 = vmatpush1.msra.mxu0 0.0
        %1119 = vmatprep.subr.mxu0 0.0
        %1120 = vmatpush1.msra.mxu0 0.0
        %1121 = vmatprep.subr.mxu0 0.0
        %1122 = vmatpush1.msra.mxu0 0.0
        %1123 = vmatprep.subr.mxu0 0.0
        %1124 = vmatpush1.msra.mxu0 0.0
        %1125 = vmatprep.subr.mxu0 0.0
        %1126 = vmatpush1.msra.mxu0 0.0
        %1127 = vmatprep.subr.mxu0 0.0
        %1128 = vmatpush1.msra.mxu0 0.0
        %1129 = vmatprep.subr.mxu0 0.0
        %1130 = vmatpush1.msra.mxu0 0.0
        %1131 = vmatprep.subr.mxu0 0.0
        %1132 = vmatpush1.msra.mxu0 0.0
        %1133 = vmatprep.subr.mxu0 0.0
        %1134 = vmatpush1.msra.mxu0 0.0
        %1135 = vmatprep.subr.mxu0 0.0
        %1136 = vmatpush1.msra.mxu0 0.0
        %1137 = vmatprep.subr.mxu0 0.0
        %1138 = vmatpush1.msra.mxu0 0.0
        %1139 = vmatprep.subr.mxu0 0.0
        %1140 = vmatpush1.msra.mxu0 0.0
        %1141 = vmatprep.subr.mxu0 0.0
        %1142 = vmatpush1.msra.mxu0 0.0
        %1143 = vmatprep.subr.mxu0 0.0
        %1144 = vmatpush1.msra.mxu0 0.0
        %1145 = vmatprep.subr.mxu0 0.0
        %1146 = vmatpush1.msra.mxu0 0.0
        %1147 = vmatprep.subr.mxu0 0.0
        %1148 = vmatpush1.msra.mxu0 0.0
        %1149 = vmatprep.subr.mxu0 0.0
        %1150 = vmatpush1.msra.mxu0 0.0
        %1151 = vmatprep.mubr.f32.mxu0 0.0
        %1152 = vmatmul.mubr.f32.gmra.mrb[0].mxu0 %v1085
        %v1153 = vpop.f32.mrb[0].mxu0
        %v1154 = vadd.f32 0.0, %v1153
        %v1155 = vpop.f32.mrb[0].mxu0
        %1156 = vdwg.mxu0
        %v1157 = vxor.u32 %v1154, 2147483648
        %v1158 = vmul.f32 %v1157, 1.442695
        %v1159 = vpow.pop %v1158
        %v1160 = vadd.f32 %v1159, 1.0
        %v1161 = vrcp.pop %v1160
        %v1162 = vmul.f32 1.0, %v1161
        %v1163 = vlaneseq
        %v1164 = vshrl.u32 %v1163, 7
        %v1165 = vsub.s32 0, %v1164
        %v1166 = vrot.slane %v1162, %v1165
        %1168 = vbcast.lane.b32.xlu0 %v1166, 256
        %v1169 = vpop.permute.xlu0 %1168
        %s1171 = sor.u32 256, 8
        %1172 = vbcast.lane.b32.xlu0 %v1166, %s1171
        %v1173 = vpop.permute.xlu0 %1172
        %s1175 = sor.u32 256, 16
        %1176 = vbcast.lane.b32.xlu0 %v1166, %s1175
        %v1177 = vpop.permute.xlu0 %1176
        %s1179 = sor.u32 256, 24
        %1180 = vbcast.lane.b32.xlu0 %v1166, %s1179
        %v1181 = vpop.permute.xlu0 %1180
        %s1183 = sor.u32 256, 32
        %1184 = vbcast.lane.b32.xlu0 %v1166, %s1183
        %v1185 = vpop.permute.xlu0 %1184
        %s1187 = sor.u32 256, 40
        %1188 = vbcast.lane.b32.xlu0 %v1166, %s1187
        %v1189 = vpop.permute.xlu0 %1188
        %s1191 = sor.u32 256, 48
        %1192 = vbcast.lane.b32.xlu0 %v1166, %s1191
        %v1193 = vpop.permute.xlu0 %1192
        %s1195 = sor.u32 256, 56
        %1196 = vbcast.lane.b32.xlu0 %v1166, %s1195
        %v1197 = vpop.permute.xlu0 %1196
        %s1199 = sor.u32 256, 64
        %1200 = vbcast.lane.b32.xlu0 %v1166, %s1199
        %v1201 = vpop.permute.xlu0 %1200
        %s1203 = sor.u32 256, 72
        %1204 = vbcast.lane.b32.xlu0 %v1166, %s1203
        %v1205 = vpop.permute.xlu0 %1204
        %s1207 = sor.u32 256, 80
        %1208 = vbcast.lane.b32.xlu0 %v1166, %s1207
        %v1209 = vpop.permute.xlu0 %1208
        %s1211 = sor.u32 256, 88
        %1212 = vbcast.lane.b32.xlu0 %v1166, %s1211
        %v1213 = vpop.permute.xlu0 %1212
        %s1215 = sor.u32 256, 96
        %1216 = vbcast.lane.b32.xlu0 %v1166, %s1215
        %v1217 = vpop.permute.xlu0 %1216
        %s1219 = sor.u32 256, 104
        %1220 = vbcast.lane.b32.xlu0 %v1166, %s1219
        %v1221 = vpop.permute.xlu0 %1220
        %s1223 = sor.u32 256, 112
        %1224 = vbcast.lane.b32.xlu0 %v1166, %s1223
        %v1225 = vpop.permute.xlu0 %1224
        %s1227 = sor.u32 256, 120
        %1228 = vbcast.lane.b32.xlu0 %v1166, %s1227
        %v1229 = vpop.permute.xlu0 %1228
        %v1230 = vlaneseq
        %v1231 = vshrl.u32 %v1230, 7
        %v1232 = vsub.s32 1, %v1231
        %v1233 = vrot.slane %v1162, %v1232
        %1235 = vbcast.lane.b32.xlu0 %v1233, 256
        %v1236 = vpop.permute.xlu0 %1235
        %s1238 = sor.u32 256, 8
        %1239 = vbcast.lane.b32.xlu0 %v1233, %s1238
        %v1240 = vpop.permute.xlu0 %1239
        %s1242 = sor.u32 256, 16
        %1243 = vbcast.lane.b32.xlu0 %v1233, %s1242
        %v1244 = vpop.permute.xlu0 %1243
        %s1246 = sor.u32 256, 24
        %1247 = vbcast.lane.b32.xlu0 %v1233, %s1246
        %v1248 = vpop.permute.xlu0 %1247
        %s1250 = sor.u32 256, 32
        %1251 = vbcast.lane.b32.xlu0 %v1233, %s1250
        %v1252 = vpop.permute.xlu0 %1251
        %s1254 = sor.u32 256, 40
        %1255 = vbcast.lane.b32.xlu0 %v1233, %s1254
        %v1256 = vpop.permute.xlu0 %1255
        %s1258 = sor.u32 256, 48
        %1259 = vbcast.lane.b32.xlu0 %v1233, %s1258
        %v1260 = vpop.permute.xlu0 %1259
        %s1262 = sor.u32 256, 56
        %1263 = vbcast.lane.b32.xlu0 %v1233, %s1262
        %v1264 = vpop.permute.xlu0 %1263
        %s1266 = sor.u32 256, 64
        %1267 = vbcast.lane.b32.xlu0 %v1233, %s1266
        %v1268 = vpop.permute.xlu0 %1267
        %s1270 = sor.u32 256, 72
        %1271 = vbcast.lane.b32.xlu0 %v1233, %s1270
        %v1272 = vpop.permute.xlu0 %1271
        %s1274 = sor.u32 256, 80
        %1275 = vbcast.lane.b32.xlu0 %v1233, %s1274
        %v1276 = vpop.permute.xlu0 %1275
        %s1278 = sor.u32 256, 88
        %1279 = vbcast.lane.b32.xlu0 %v1233, %s1278
        %v1280 = vpop.permute.xlu0 %1279
        %s1282 = sor.u32 256, 96
        %1283 = vbcast.lane.b32.xlu0 %v1233, %s1282
        %v1284 = vpop.permute.xlu0 %1283
        %s1286 = sor.u32 256, 104
        %1287 = vbcast.lane.b32.xlu0 %v1233, %s1286
        %v1288 = vpop.permute.xlu0 %1287
        %s1290 = sor.u32 256, 112
        %1291 = vbcast.lane.b32.xlu0 %v1233, %s1290
        %v1292 = vpop.permute.xlu0 %1291
        %s1294 = sor.u32 256, 120
        %1295 = vbcast.lane.b32.xlu0 %v1233, %s1294
        %v1296 = vpop.permute.xlu0 %1295
        %v1297 = vlaneseq
        %v1298 = vshrl.u32 %v1297, 7
        %v1299 = vsub.s32 2, %v1298
        %v1300 = vrot.slane %v1162, %v1299
        %1302 = vbcast.lane.b32.xlu0 %v1300, 256
        %v1303 = vpop.permute.xlu0 %1302
        %s1305 = sor.u32 256, 8
        %1306 = vbcast.lane.b32.xlu0 %v1300, %s1305
        %v1307 = vpop.permute.xlu0 %1306
        %s1309 = sor.u32 256, 16
        %1310 = vbcast.lane.b32.xlu0 %v1300, %s1309
        %v1311 = vpop.permute.xlu0 %1310
        %s1313 = sor.u32 256, 24
        %1314 = vbcast.lane.b32.xlu0 %v1300, %s1313
        %v1315 = vpop.permute.xlu0 %1314
        %s1317 = sor.u32 256, 32
        %1318 = vbcast.lane.b32.xlu0 %v1300, %s1317
        %v1319 = vpop.permute.xlu0 %1318
        %s1321 = sor.u32 256, 40
        %1322 = vbcast.lane.b32.xlu0 %v1300, %s1321
        %v1323 = vpop.permute.xlu0 %1322
        %s1325 = sor.u32 256, 48
        %1326 = vbcast.lane.b32.xlu0 %v1300, %s1325
        %v1327 = vpop.permute.xlu0 %1326
        %s1329 = sor.u32 256, 56
        %1330 = vbcast.lane.b32.xlu0 %v1300, %s1329
        %v1331 = vpop.permute.xlu0 %1330
        %s1333 = sor.u32 256, 64
        %1334 = vbcast.lane.b32.xlu0 %v1300, %s1333
        %v1335 = vpop.permute.xlu0 %1334
        %s1337 = sor.u32 256, 72
        %1338 = vbcast.lane.b32.xlu0 %v1300, %s1337
        %v1339 = vpop.permute.xlu0 %1338
        %s1341 = sor.u32 256, 80
        %1342 = vbcast.lane.b32.xlu0 %v1300, %s1341
        %v1343 = vpop.permute.xlu0 %1342
        %s1345 = sor.u32 256, 88
        %1346 = vbcast.lane.b32.xlu0 %v1300, %s1345
        %v1347 = vpop.permute.xlu0 %1346
        %s1349 = sor.u32 256, 96
        %1350 = vbcast.lane.b32.xlu0 %v1300, %s1349
        %v1351 = vpop.permute.xlu0 %1350
        %s1353 = sor.u32 256, 104
        %1354 = vbcast.lane.b32.xlu0 %v1300, %s1353
        %v1355 = vpop.permute.xlu0 %1354
        %s1357 = sor.u32 256, 112
        %1358 = vbcast.lane.b32.xlu0 %v1300, %s1357
        %v1359 = vpop.permute.xlu0 %1358
        %s1361 = sor.u32 256, 120
        %1362 = vbcast.lane.b32.xlu0 %v1300, %s1361
        %v1363 = vpop.permute.xlu0 %1362
        %v1364 = vlaneseq
        %v1365 = vshrl.u32 %v1364, 7
        %v1366 = vsub.s32 3, %v1365
        %v1367 = vrot.slane %v1162, %v1366
        %1369 = vbcast.lane.b32.xlu0 %v1367, 256
        %v1370 = vpop.permute.xlu0 %1369
        %s1372 = sor.u32 256, 8
        %1373 = vbcast.lane.b32.xlu0 %v1367, %s1372
        %v1374 = vpop.permute.xlu0 %1373
        %s1376 = sor.u32 256, 16
        %1377 = vbcast.lane.b32.xlu0 %v1367, %s1376
        %v1378 = vpop.permute.xlu0 %1377
        %s1380 = sor.u32 256, 24
        %1381 = vbcast.lane.b32.xlu0 %v1367, %s1380
        %v1382 = vpop.permute.xlu0 %1381
        %s1384 = sor.u32 256, 32
        %1385 = vbcast.lane.b32.xlu0 %v1367, %s1384
        %v1386 = vpop.permute.xlu0 %1385
        %s1388 = sor.u32 256, 40
        %1389 = vbcast.lane.b32.xlu0 %v1367, %s1388
        %v1390 = vpop.permute.xlu0 %1389
        %s1392 = sor.u32 256, 48
        %1393 = vbcast.lane.b32.xlu0 %v1367, %s1392
        %v1394 = vpop.permute.xlu0 %1393
        %s1396 = sor.u32 256, 56
        %1397 = vbcast.lane.b32.xlu0 %v1367, %s1396
        %v1398 = vpop.permute.xlu0 %1397
        %s1400 = sor.u32 256, 64
        %1401 = vbcast.lane.b32.xlu0 %v1367, %s1400
        %v1402 = vpop.permute.xlu0 %1401
        %s1404 = sor.u32 256, 72
        %1405 = vbcast.lane.b32.xlu0 %v1367, %s1404
        %v1406 = vpop.permute.xlu0 %1405
        %s1408 = sor.u32 256, 80
        %1409 = vbcast.lane.b32.xlu0 %v1367, %s1408
        %v1410 = vpop.permute.xlu0 %1409
        %s1412 = sor.u32 256, 88
        %1413 = vbcast.lane.b32.xlu0 %v1367, %s1412
        %v1414 = vpop.permute.xlu0 %1413
        %s1416 = sor.u32 256, 96
        %1417 = vbcast.lane.b32.xlu0 %v1367, %s1416
        %v1418 = vpop.permute.xlu0 %1417
        %s1420 = sor.u32 256, 104
        %1421 = vbcast.lane.b32.xlu0 %v1367, %s1420
        %v1422 = vpop.permute.xlu0 %1421
        %s1424 = sor.u32 256, 112
        %1425 = vbcast.lane.b32.xlu0 %v1367, %s1424
        %v1426 = vpop.permute.xlu0 %1425
        %s1428 = sor.u32 256, 120
        %1429 = vbcast.lane.b32.xlu0 %v1367, %s1428
        %v1430 = vpop.permute.xlu0 %1429
        %v1431 = vmul.f32 %v192, %v1169
        %v1432 = vmul.f32 %v193, %v1169
        %v1433 = vmul.f32 %v194, %v1173
        %v1434 = vmul.f32 %v195, %v1173
        %v1435 = vmul.f32 %v196, %v1177
        %v1436 = vmul.f32 %v197, %v1177
        %v1437 = vmul.f32 %v198, %v1181
        %v1438 = vmul.f32 %v199, %v1181
        %v1439 = vmul.f32 %v200, %v1185
        %v1440 = vmul.f32 %v201, %v1185
        %v1441 = vmul.f32 %v202, %v1189
        %v1442 = vmul.f32 %v203, %v1189
        %v1443 = vmul.f32 %v204, %v1193
        %v1444 = vmul.f32 %v205, %v1193
        %v1445 = vmul.f32 %v206, %v1197
        %v1446 = vmul.f32 %v207, %v1197
        %v1447 = vmul.f32 %v208, %v1201
        %v1448 = vmul.f32 %v209, %v1201
        %v1449 = vmul.f32 %v210, %v1205
        %v1450 = vmul.f32 %v211, %v1205
        %v1451 = vmul.f32 %v212, %v1209
        %v1452 = vmul.f32 %v213, %v1209
        %v1453 = vmul.f32 %v214, %v1213
        %v1454 = vmul.f32 %v215, %v1213
        %v1455 = vmul.f32 %v216, %v1217
        %v1456 = vmul.f32 %v217, %v1217
        %v1457 = vmul.f32 %v218, %v1221
        %v1458 = vmul.f32 %v219, %v1221
        %v1459 = vmul.f32 %v220, %v1225
        %v1460 = vmul.f32 %v221, %v1225
        %v1461 = vmul.f32 %v222, %v1229
        %v1462 = vmul.f32 %v223, %v1229
        %v1463 = vmul.f32 %v224, %v1236
        %v1464 = vmul.f32 %v225, %v1236
        %v1465 = vmul.f32 %v226, %v1240
        %v1466 = vmul.f32 %v227, %v1240
        %v1467 = vmul.f32 %v228, %v1244
        %v1468 = vmul.f32 %v229, %v1244
        %v1469 = vmul.f32 %v230, %v1248
        %v1470 = vmul.f32 %v231, %v1248
        %v1471 = vmul.f32 %v232, %v1252
        %v1472 = vmul.f32 %v233, %v1252
        %v1473 = vmul.f32 %v234, %v1256
        %v1474 = vmul.f32 %v235, %v1256
        %v1475 = vmul.f32 %v236, %v1260
        %v1476 = vmul.f32 %v237, %v1260
        %v1477 = vmul.f32 %v238, %v1264
        %v1478 = vmul.f32 %v239, %v1264
        %v1479 = vmul.f32 %v240, %v1268
        %v1480 = vmul.f32 %v241, %v1268
        %v1481 = vmul.f32 %v242, %v1272
        %v1482 = vmul.f32 %v243, %v1272
        %v1483 = vmul.f32 %v244, %v1276
        %v1484 = vmul.f32 %v245, %v1276
        %v1485 = vmul.f32 %v246, %v1280
        %v1486 = vmul.f32 %v247, %v1280
        %v1487 = vmul.f32 %v248, %v1284
        %v1488 = vmul.f32 %v249, %v1284
        %v1489 = vmul.f32 %v250, %v1288
        %v1490 = vmul.f32 %v251, %v1288
        %v1491 = vmul.f32 %v252, %v1292
        %v1492 = vmul.f32 %v253, %v1292
        %v1493 = vmul.f32 %v254, %v1296
        %v1494 = vmul.f32 %v255, %v1296
        %v1495 = vmul.f32 %v256, %v1303
        %v1496 = vmul.f32 %v257, %v1303
        %v1497 = vmul.f32 %v258, %v1307
        %v1498 = vmul.f32 %v259, %v1307
        %v1499 = vmul.f32 %v260, %v1311
        %v1500 = vmul.f32 %v261, %v1311
        %v1501 = vmul.f32 %v262, %v1315
        %v1502 = vmul.f32 %v263, %v1315
        %v1503 = vmul.f32 %v264, %v1319
        %v1504 = vmul.f32 %v265, %v1319
        %v1505 = vmul.f32 %v266, %v1323
        %v1506 = vmul.f32 %v267, %v1323
        %v1507 = vmul.f32 %v268, %v1327
        %v1508 = vmul.f32 %v269, %v1327
        %v1509 = vmul.f32 %v270, %v1331
        %v1510 = vmul.f32 %v271, %v1331
        %v1511 = vmul.f32 %v272, %v1335
        %v1512 = vmul.f32 %v273, %v1335
        %v1513 = vmul.f32 %v274, %v1339
        %v1514 = vmul.f32 %v275, %v1339
        %v1515 = vmul.f32 %v276, %v1343
        %v1516 = vmul.f32 %v277, %v1343
        %v1517 = vmul.f32 %v278, %v1347
        %v1518 = vmul.f32 %v279, %v1347
        %v1519 = vmul.f32 %v280, %v1351
        %v1520 = vmul.f32 %v281, %v1351
        %v1521 = vmul.f32 %v282, %v1355
        %v1522 = vmul.f32 %v283, %v1355
        %v1523 = vmul.f32 %v284, %v1359
        %v1524 = vmul.f32 %v285, %v1359
        %v1525 = vmul.f32 %v286, %v1363
        %v1526 = vmul.f32 %v287, %v1363
        %v1527 = vmul.f32 %v288, %v1370
        %v1528 = vmul.f32 %v289, %v1370
        %v1529 = vmul.f32 %v290, %v1374
        %v1530 = vmul.f32 %v291, %v1374
        %v1531 = vmul.f32 %v292, %v1378
        %v1532 = vmul.f32 %v293, %v1378
        %v1533 = vmul.f32 %v294, %v1382
        %v1534 = vmul.f32 %v295, %v1382
        %v1535 = vmul.f32 %v296, %v1386
        %v1536 = vmul.f32 %v297, %v1386
        %v1537 = vmul.f32 %v298, %v1390
        %v1538 = vmul.f32 %v299, %v1390
        %v1539 = vmul.f32 %v300, %v1394
        %v1540 = vmul.f32 %v301, %v1394
        %v1541 = vmul.f32 %v302, %v1398
        %v1542 = vmul.f32 %v303, %v1398
        %v1543 = vmul.f32 %v304, %v1402
        %v1544 = vmul.f32 %v305, %v1402
        %v1545 = vmul.f32 %v306, %v1406
        %v1546 = vmul.f32 %v307, %v1406
        %v1547 = vmul.f32 %v308, %v1410
        %v1548 = vmul.f32 %v309, %v1410
        %v1549 = vmul.f32 %v310, %v1414
        %v1550 = vmul.f32 %v311, %v1414
        %v1551 = vmul.f32 %v312, %v1418
        %v1552 = vmul.f32 %v313, %v1418
        %v1553 = vmul.f32 %v314, %v1422
        %v1554 = vmul.f32 %v315, %v1422
        %v1555 = vmul.f32 %v316, %v1426
        %v1556 = vmul.f32 %v317, %v1426
        %v1557 = vmul.f32 %v318, %v1430
        %v1558 = vmul.f32 %v319, %v1430
        %1559 = vst [vmem:[%s189] sm:$0xff] %v1431
        %1560 = vst [vmem:[%s189 + $0x8] sm:$0xff] %v1432
        %1561 = vst [vmem:[%s189 + $0x10] sm:$0xff] %v1433
        %1562 = vst [vmem:[%s189 + $0x18] sm:$0xff] %v1434
        %1563 = vst [vmem:[%s189 + $0x20] sm:$0xff] %v1435
        %1564 = vst [vmem:[%s189 + $0x28] sm:$0xff] %v1436
        %1565 = vst [vmem:[%s189 + $0x30] sm:$0xff] %v1437
        %1566 = vst [vmem:[%s189 + $0x38] sm:$0xff] %v1438
        %1567 = vst [vmem:[%s189 + $0x40] sm:$0xff] %v1439
        %1568 = vst [vmem:[%s189 + $0x48] sm:$0xff] %v1440
        %1569 = vst [vmem:[%s189 + $0x50] sm:$0xff] %v1441
        %1570 = vst [vmem:[%s189 + $0x58] sm:$0xff] %v1442
        %1571 = vst [vmem:[%s189 + $0x60] sm:$0xff] %v1443
        %1572 = vst [vmem:[%s189 + $0x68] sm:$0xff] %v1444
        %1573 = vst [vmem:[%s189 + $0x70] sm:$0xff] %v1445
        %1574 = vst [vmem:[%s189 + $0x78] sm:$0xff] %v1446
        %1575 = vst [vmem:[%s189 + $0x80] sm:$0xff] %v1447
        %1576 = vst [vmem:[%s189 + $0x88] sm:$0xff] %v1448
        %1577 = vst [vmem:[%s189 + $0x90] sm:$0xff] %v1449
        %1578 = vst [vmem:[%s189 + $0x98] sm:$0xff] %v1450
        %1579 = vst [vmem:[%s189 + $0xa0] sm:$0xff] %v1451
        %1580 = vst [vmem:[%s189 + $0xa8] sm:$0xff] %v1452
        %1581 = vst [vmem:[%s189 + $0xb0] sm:$0xff] %v1453
        %1582 = vst [vmem:[%s189 + $0xb8] sm:$0xff] %v1454
        %1583 = vst [vmem:[%s189 + $0xc0] sm:$0xff] %v1455
        %1584 = vst [vmem:[%s189 + $0xc8] sm:$0xff] %v1456
        %1585 = vst [vmem:[%s189 + $0xd0] sm:$0xff] %v1457
        %1586 = vst [vmem:[%s189 + $0xd8] sm:$0xff] %v1458
        %1587 = vst [vmem:[%s189 + $0xe0] sm:$0xff] %v1459
        %1588 = vst [vmem:[%s189 + $0xe8] sm:$0xff] %v1460
        %1589 = vst [vmem:[%s189 + $0xf0] sm:$0xff] %v1461
        %1590 = vst [vmem:[%s189 + $0xf8] sm:$0xff] %v1462
        %1591 = vst [vmem:[%s189 + $0x100] sm:$0xff] %v1463
        %1592 = vst [vmem:[%s189 + $0x108] sm:$0xff] %v1464
        %1593 = vst [vmem:[%s189 + $0x110] sm:$0xff] %v1465
        %1594 = vst [vmem:[%s189 + $0x118] sm:$0xff] %v1466
        %1595 = vst [vmem:[%s189 + $0x120] sm:$0xff] %v1467
        %1596 = vst [vmem:[%s189 + $0x128] sm:$0xff] %v1468
        %1597 = vst [vmem:[%s189 + $0x130] sm:$0xff] %v1469
        %1598 = vst [vmem:[%s189 + $0x138] sm:$0xff] %v1470
        %1599 = vst [vmem:[%s189 + $0x140] sm:$0xff] %v1471
        %1600 = vst [vmem:[%s189 + $0x148] sm:$0xff] %v1472
        %1601 = vst [vmem:[%s189 + $0x150] sm:$0xff] %v1473
        %1602 = vst [vmem:[%s189 + $0x158] sm:$0xff] %v1474
        %1603 = vst [vmem:[%s189 + $0x160] sm:$0xff] %v1475
        %1604 = vst [vmem:[%s189 + $0x168] sm:$0xff] %v1476
        %1605 = vst [vmem:[%s189 + $0x170] sm:$0xff] %v1477
        %1606 = vst [vmem:[%s189 + $0x178] sm:$0xff] %v1478
        %1607 = vst [vmem:[%s189 + $0x180] sm:$0xff] %v1479
        %1608 = vst [vmem:[%s189 + $0x188] sm:$0xff] %v1480
        %1609 = vst [vmem:[%s189 + $0x190] sm:$0xff] %v1481
        %1610 = vst [vmem:[%s189 + $0x198] sm:$0xff] %v1482
        %1611 = vst [vmem:[%s189 + $0x1a0] sm:$0xff] %v1483
        %1612 = vst [vmem:[%s189 + $0x1a8] sm:$0xff] %v1484
        %1613 = vst [vmem:[%s189 + $0x1b0] sm:$0xff] %v1485
        %1614 = vst [vmem:[%s189 + $0x1b8] sm:$0xff] %v1486
        %1615 = vst [vmem:[%s189 + $0x1c0] sm:$0xff] %v1487
        %1616 = vst [vmem:[%s189 + $0x1c8] sm:$0xff] %v1488
        %1617 = vst [vmem:[%s189 + $0x1d0] sm:$0xff] %v1489
        %1618 = vst [vmem:[%s189 + $0x1d8] sm:$0xff] %v1490
        %1619 = vst [vmem:[%s189 + $0x1e0] sm:$0xff] %v1491
        %1620 = vst [vmem:[%s189 + $0x1e8] sm:$0xff] %v1492
        %1621 = vst [vmem:[%s189 + $0x1f0] sm:$0xff] %v1493
        %1622 = vst [vmem:[%s189 + $0x1f8] sm:$0xff] %v1494
        %1623 = vst [vmem:[%s189 + $0x200] sm:$0xff] %v1495
        %1624 = vst [vmem:[%s189 + $0x208] sm:$0xff] %v1496
        %1625 = vst [vmem:[%s189 + $0x210] sm:$0xff] %v1497
        %1626 = vst [vmem:[%s189 + $0x218] sm:$0xff] %v1498
        %1627 = vst [vmem:[%s189 + $0x220] sm:$0xff] %v1499
        %1628 = vst [vmem:[%s189 + $0x228] sm:$0xff] %v1500
        %1629 = vst [vmem:[%s189 + $0x230] sm:$0xff] %v1501
        %1630 = vst [vmem:[%s189 + $0x238] sm:$0xff] %v1502
        %1631 = vst [vmem:[%s189 + $0x240] sm:$0xff] %v1503
        %1632 = vst [vmem:[%s189 + $0x248] sm:$0xff] %v1504
        %1633 = vst [vmem:[%s189 + $0x250] sm:$0xff] %v1505
        %1634 = vst [vmem:[%s189 + $0x258] sm:$0xff] %v1506
        %1635 = vst [vmem:[%s189 + $0x260] sm:$0xff] %v1507
        %1636 = vst [vmem:[%s189 + $0x268] sm:$0xff] %v1508
        %1637 = vst [vmem:[%s189 + $0x270] sm:$0xff] %v1509
        %1638 = vst [vmem:[%s189 + $0x278] sm:$0xff] %v1510
        %1639 = vst [vmem:[%s189 + $0x280] sm:$0xff] %v1511
        %1640 = vst [vmem:[%s189 + $0x288] sm:$0xff] %v1512
        %1641 = vst [vmem:[%s189 + $0x290] sm:$0xff] %v1513
        %1642 = vst [vmem:[%s189 + $0x298] sm:$0xff] %v1514
        %1643 = vst [vmem:[%s189 + $0x2a0] sm:$0xff] %v1515
        %1644 = vst [vmem:[%s189 + $0x2a8] sm:$0xff] %v1516
        %1645 = vst [vmem:[%s189 + $0x2b0] sm:$0xff] %v1517
        %1646 = vst [vmem:[%s189 + $0x2b8] sm:$0xff] %v1518
        %1647 = vst [vmem:[%s189 + $0x2c0] sm:$0xff] %v1519
        %1648 = vst [vmem:[%s189 + $0x2c8] sm:$0xff] %v1520
        %1649 = vst [vmem:[%s189 + $0x2d0] sm:$0xff] %v1521
        %1650 = vst [vmem:[%s189 + $0x2d8] sm:$0xff] %v1522
        %1651 = vst [vmem:[%s189 + $0x2e0] sm:$0xff] %v1523
        %1652 = vst [vmem:[%s189 + $0x2e8] sm:$0xff] %v1524
        %1653 = vst [vmem:[%s189 + $0x2f0] sm:$0xff] %v1525
        %1654 = vst [vmem:[%s189 + $0x2f8] sm:$0xff] %v1526
        %1655 = vst [vmem:[%s189 + $0x300] sm:$0xff] %v1527
        %1656 = vst [vmem:[%s189 + $0x308] sm:$0xff] %v1528
        %1657 = vst [vmem:[%s189 + $0x310] sm:$0xff] %v1529
        %1658 = vst [vmem:[%s189 + $0x318] sm:$0xff] %v1530
        %1659 = vst [vmem:[%s189 + $0x320] sm:$0xff] %v1531
        %1660 = vst [vmem:[%s189 + $0x328] sm:$0xff] %v1532
        %1661 = vst [vmem:[%s189 + $0x330] sm:$0xff] %v1533
        %1662 = vst [vmem:[%s189 + $0x338] sm:$0xff] %v1534
        %1663 = vst [vmem:[%s189 + $0x340] sm:$0xff] %v1535
        %1664 = vst [vmem:[%s189 + $0x348] sm:$0xff] %v1536
        %1665 = vst [vmem:[%s189 + $0x350] sm:$0xff] %v1537
        %1666 = vst [vmem:[%s189 + $0x358] sm:$0xff] %v1538
        %1667 = vst [vmem:[%s189 + $0x360] sm:$0xff] %v1539
        %1668 = vst [vmem:[%s189 + $0x368] sm:$0xff] %v1540
        %1669 = vst [vmem:[%s189 + $0x370] sm:$0xff] %v1541
        %1670 = vst [vmem:[%s189 + $0x378] sm:$0xff] %v1542
        %1671 = vst [vmem:[%s189 + $0x380] sm:$0xff] %v1543
        %1672 = vst [vmem:[%s189 + $0x388] sm:$0xff] %v1544
        %1673 = vst [vmem:[%s189 + $0x390] sm:$0xff] %v1545
        %1674 = vst [vmem:[%s189 + $0x398] sm:$0xff] %v1546
        %1675 = vst [vmem:[%s189 + $0x3a0] sm:$0xff] %v1547
        %1676 = vst [vmem:[%s189 + $0x3a8] sm:$0xff] %v1548
        %1677 = vst [vmem:[%s189 + $0x3b0] sm:$0xff] %v1549
        %1678 = vst [vmem:[%s189 + $0x3b8] sm:$0xff] %v1550
        %1679 = vst [vmem:[%s189 + $0x3c0] sm:$0xff] %v1551
        %1680 = vst [vmem:[%s189 + $0x3c8] sm:$0xff] %v1552
        %1681 = vst [vmem:[%s189 + $0x3d0] sm:$0xff] %v1553
        %1682 = vst [vmem:[%s189 + $0x3d8] sm:$0xff] %v1554
        %1683 = vst [vmem:[%s189 + $0x3e0] sm:$0xff] %v1555
        %1684 = vst [vmem:[%s189 + $0x3e8] sm:$0xff] %v1556
        %1685 = vst [vmem:[%s189 + $0x3f0] sm:$0xff] %v1557
        %1686 = vst [vmem:[%s189 + $0x3f8] sm:$0xff] %v1558
        %s1687 = sand.u32 %s96, 1
        %s1688 = scalar_lea.sflag [#allocation4], %s1687
        %s1689 = sand.u32 %s96, 1
        %s1690 = smul.addr %s1689, 1024
        %s1691 = scalar_lea.vmem [#allocation5], %s1690
        // Predicated region
        $region37: #{tpu_custom_call.1} parent=31 // pred_check
          %p1692 = pneg %p106
        $region38: #{tpu_custom_call.1} parent=31 // pred_check_branch
          %1694 = sbr.rel (%p1692) target = $region40
        $region39: #{tpu_custom_call.1} parent=31 // pred_region
          %s1695 = smul.u32 4, %s20
          %s1697 = ssub.s32 16384, 16384
          %1698 = vsyncadd %s1688, %s1697
          %s1699 = smul.addr %s1695, 32
          %s1700 = smul.addr %s1699, 128
          %s1701 = scalar_lea.hbm %s3, %s1700
          %s1702 = sshll.u32 %s1691, 4
          %s1703 = int_to_ptr.vmem [resolvable:$true] %s1702
          %1708 = dma.vmem_to_hbm [thread:$0]  %s1703, 16384, %s1701, %s1688, 256, 256, 16
        $region40: #{tpu_custom_call.1} parent=31 // pred_fallthru
          _
      $region32: #{tpu_custom_call.1} parent=5 // pred_fallthru
        _
      %p1709 = scmp.le.s32.totalorder 2, %s15
      // Predicated region
      $region41: #{tpu_custom_call.1} parent=5 // pred_check
        %p1710 = pneg %p1709
      $region42: #{tpu_custom_call.1} parent=5 // pred_check_branch
        %1712 = sbr.rel (%p1710) target = $region44
      $region43: #{tpu_custom_call.1} parent=5 // pred_region
        %s1713 = ssub.s32 %s15, 2
        // Predicated region
        $region45: #{tpu_custom_call.1} parent=43 // pred_check
          %p1714 = pneg %p112
        $region46: #{tpu_custom_call.1} parent=43 // pred_check_branch
          %1716 = sbr.rel (%p1714) target = $region48
        $region47: #{tpu_custom_call.1} parent=43 // pred_region
          %s1717 = sand.u32 %s97, 1
          %s1718 = scalar_lea.sflag [#allocation4], %s1717
          %s1719 = sand.u32 %s97, 1
          %s1720 = smul.addr %s1719, 1024
          %s1721 = scalar_lea.vmem [#allocation5], %s1720
          %1722 = dma.done %s1718, 16384
        $region48: #{tpu_custom_call.1} parent=43 // pred_fallthru
          _
      $region44: #{tpu_custom_call.1} parent=5 // pred_fallthru
        _
    $region6: #{tpu_custom_call.1} parent=1 // loop_footer
      %s19 = sadd.s32 1, %s15
    $region7: #{tpu_custom_call.1} parent=1 // loop_footer_branch
      %14 = sbr.rel target = $region3
    $region8: #{tpu_custom_call.1} parent=1 // loop_exit
      _
    %1723 = vsyncpa [#allocation3], 1
    %s1724 = scalar_lea.sflag [#allocation3], 1
    %1725 = vsyncpa %s1724, 1
    %1726 = vsyncpa [#allocation4], 1
    %s1727 = scalar_lea.sflag [#allocation4], 1
    %1728 = vsyncpa %s1727, 1

</llo_original>
